<compile_context>
chip_gen: v5e
topology: v5e:2x2
jax: 0.10.0
libtpu: 0.0.40
codegen_flags: <defaults>
</compile_context>

<pallas_src>
import functools

import jax
import jax.numpy as jnp
from jax.experimental import pallas as pl
from jax.experimental.pallas import tpu as pltpu

# ----------------------------------------------------------------------------
# Configuration (small, deterministic, consistent with the module constructor)
# ----------------------------------------------------------------------------
CFG = dict(
    batch=2,
    num_audio_channels=4,
    num_video_channels=8,
    num_rtfs_blocks=2,
    num_caf_blocks=2,
    hidden_dim=16,
    hidden_dim_rnn=16,          # TODO(synk): RNN path of RTFSBlock unspecified; modelled as conv MLP.
    num_upsample_depth_rtfs=2,  # TODO(synk): multi-scale up/downsampling in RTFS block unspecified.
    num_upsample_depth_vp=2,    # TODO(synk): multi-scale up/downsampling in VP block unspecified.
    num_heads_caf=2,            # TODO(synk): multi-head attention in CAF simplified to gated fusion.
    n_fft=16,
    hop_length=8,
    n_freq=9,                   # n_fft // 2 + 1
    n_samples=128,
    video_frames=8,
    video_hw=8,
    c_sources=2,
)

FCP = 128                       # lane-padded audio feature width (one vreg of lanes)


# ----------------------------------------------------------------------------
# The single fused Pallas kernel (one grid step = one batch, all sources)
# ----------------------------------------------------------------------------
def _artfs_kernel(frames_ref, vid_ref, sa_ref, sh_ref, sc_ref, sv_ref, out_ref,
                  *, la, lh, lc, lv, c_src, ta, hop, fcp, num_caf, num_rtfs):
    f32 = jnp.float32

    def take(ref, layout, name):
        o, r, c = layout[name]                       # static python ints -> zero-cost views
        return ref[o:o + r, 0:c]

    # ---- hoisted weight/bias loads: each slab slice is traced exactly once ----
    wvenc, bvenc = take(sv_ref, lv, "wvenc"), take(sv_ref, lv, "bvenc")
    wvp1, bvp1 = take(sv_ref, lv, "wvp1"), take(sv_ref, lv, "bvp1")
    wvp2, bvp2 = take(sv_ref, lv, "wvp2"), take(sv_ref, lv, "bvp2")
    up, dn = take(sv_ref, lv, "up"), take(sv_ref, lv, "dn")
    poolw = [take(sv_ref, lv, "poolw%d" % i) for i in range(num_caf)]
    bcafv = [take(sv_ref, lv, "bcafv%d" % i) for i in range(num_caf)]
    wcafa = [take(sc_ref, lc, "wcafa%d" % i) for i in range(num_caf + 1)]
    bcafa = [take(sc_ref, lc, "bcafa%d" % i) for i in range(num_caf + 1)]
    wenc, benc = take(sa_ref, la, "wenc"), take(sa_ref, la, "benc")
    wr2, br2 = take(sa_ref, la, "wr2"), take(sa_ref, la, "br2")
    ws3, bs3 = take(sa_ref, la, "ws3"), take(sa_ref, la, "bs3")
    wdec, bdec = take(sa_ref, la, "wdec"), take(sa_ref, la, "bdec")
    wola = take(sa_ref, la, "wola")
    wr1, br1 = take(sh_ref, lh, "wr1"), take(sh_ref, lh, "br1")

    def mm(x, w, b):
        return jnp.dot(x, w, preferred_element_type=f32) + b

    frames = frames_ref[0]                            # (ta, n_fft)  one batch, shared by sources
    vid = vid_ref[0]                                  # (c_src*Tv, W*H)

    # ---- video encoder + VP block (residual channel MLP), all sources batched in M ----
    v0 = jnp.maximum(mm(vid, wvenc, bvenc), 0.0)
    v1 = v0 + mm(jnp.maximum(mm(v0, wvp1, bvp1), 0.0), wvp2, bvp2)

    # ---- audio encoder (STFT basis folded into the conv), run once per batch, tiled ----
    a0_one = mm(frames, wenc, benc)                   # (ta, FCP)
    a0 = jnp.concatenate([a0_one] * c_src, axis=0)    # (c_src*ta, FCP)

    def rtfs(a):                                      # shared RTFS block
        h = jnp.maximum(mm(a, wr1, br1), 0.0)
        return a + mm(h, wr2, br2)

    def caf_audio(i, a, v):                           # gated A/V fusion w/ skip (CAFBlock)
        gv = jnp.dot(up, jnp.dot(v, wcafa[i], preferred_element_type=f32),
                     preferred_element_type=f32) + bcafa[i]
        gate, val = gv[:, :fcp], gv[:, fcp:]          # 128-aligned split: plain vreg views
        return a + a * jax.nn.sigmoid(gate) + val

    def caf_video(i, a, v):                           # CAFVBlock (pool folded into projection)
        gate = jnp.dot(dn, jnp.dot(a, poolw[i], preferred_element_type=f32),
                       preferred_element_type=f32) + bcafv[i]
        return v + v * jax.nn.sigmoid(gate)

    a1 = rtfs(a0)
    for i in range(num_caf):
        a_next = caf_audio(i, a1, v1)
        v1 = caf_video(i, a1, v1)
        a1 = a_next
    ar = caf_audio(num_caf, a1, v1)
    for _ in range(num_rtfs):
        ar = rtfs(a0 + ar)

    # ---- S3: mask + apply ----
    mask = jnp.maximum(mm(ar, ws3, bs3), 0.0)
    feat = mask * a0                                  # (c_src*ta, FCP)

    # ---- decoder (Ca->2 conv folded with iSTFT, padded to 128 output lanes) ----
    # wola folds the 1/overlap-count normalization and zeroes the per-source pad row.
    fr = mm(feat, wdec, bdec) * wola                  # (c_src*ta, 128)

    # ---- overlap-add via masked lane rolls (lane-dense, no reshape / narrow stores) ----
    # Row t of each source is shifted right by hop*t using 4 binary roll stages selected by
    # the bits of t; real rows never wrap (max shift 112 + 16-wide frame = 128 lanes).
    rows = c_src * ta
    t_idx = jax.lax.broadcasted_iota(jnp.int32, (rows, 1), 0) & (ta - 1)
    placed, bit, shift = fr, 0, hop
    while shift < hop * ta:
        sel = ((t_idx >> bit) & 1).astype(f32)
        rolled = pltpu.roll(placed, shift=shift, axis=1)
        placed = placed + sel * (rolled - placed)
        bit += 1
        shift *= 2
    sig = jnp.concatenate(
        [jnp.sum(placed[s * ta:(s + 1) * ta], axis=0, keepdims=True) for s in range(c_src)],
        axis=0)                                       # (c_src, 128) time signal, lane dense

    # ---- peak normalize (exact divide; tiny floor only guards a degenerate all-zero row) ----
    x = sig - jnp.mean(sig, axis=-1, keepdims=True)
    peak = jnp.max(jnp.abs(x), axis=-1, keepdims=True)
    out_ref[0] = (x / jnp.maximum(peak, 1e-12)).astype(out_ref.dtype)


# ----------------------------------------------------------------------------
# Deterministic parameter init (shapes implied by the constructor)
# ----------------------------------------------------------------------------
def _lin(key, cin, cout):
    w = jax.random.normal(key, (cin, cout), jnp.float32) * (1.0 / jnp.sqrt(cin))
    b = jnp.zeros((cout,), jnp.float32)
    return w, b


def init_params(key, cfg):
    Ca, Cv, H = cfg["num_audio_channels"], cfg["num_video_channels"], cfg["hidden_dim"]
    WH = cfg["video_hw"] ** 2
    keys = iter(jax.random.split(key, 64))
    p = {}
    p["aenc"] = _lin(next(keys), 2, Ca)          # AudioEncoder: (re, im) -> Ca channels
    p["venc"] = _lin(next(keys), WH, Cv)         # VideoEncoder: spatial -> Cv embedding
    p["vp1"] = _lin(next(keys), Cv, H)           # VPBlock
    p["vp2"] = _lin(next(keys), H, Cv)
    p["rtfs1"] = _lin(next(keys), Ca, H)         # RTFSBlock (shared across calls, like the module)
    p["rtfs2"] = _lin(next(keys), H, Ca)
    p["caf_a"] = [(_lin(next(keys), Cv, Ca), _lin(next(keys), Cv, Ca))
                  for _ in range(cfg["num_caf_blocks"] + 1)]   # (gate proj, value proj)
    p["caf_v"] = [_lin(next(keys), Ca, Cv) for _ in range(cfg["num_caf_blocks"])]
    p["s3"] = _lin(next(keys), Ca, Ca)           # S3Block mask conv
    p["adec"] = _lin(next(keys), Ca, 2)          # AudioDecoder: Ca -> (re, im)
    return p


def make_stft_bases(cfg):
    n_fft, F = cfg["n_fft"], cfg["n_freq"]
    n = jnp.arange(n_fft, dtype=jnp.float32)
    k = jnp.arange(F, dtype=jnp.float32)
    ang = 2.0 * jnp.pi * jnp.outer(n, k) / n_fft                       # (n_fft, F)
    # TODO(synk): exact STFT window / centering of AudioEncoder unknown; rectangular window used.
    fwd = jnp.concatenate([jnp.cos(ang), -jnp.sin(ang)], axis=1)       # (n_fft, 2F)
    wts = jnp.ones((F,), jnp.float32).at[1:F - 1].set(2.0)             # real-signal symmetry
    inv = jnp.concatenate([(wts[:, None] * jnp.cos(ang.T)) / n_fft,
                           (-wts[:, None] * jnp.sin(ang.T)) / n_fft], axis=0)  # (2F, n_fft)
    return fwd, inv


# ----------------------------------------------------------------------------
# Weight preparation: fold, pad, and pack everything into 4 VMEM slabs
# ----------------------------------------------------------------------------
def _pack_rows(entries):
    """Pack (name, 2-D array) pairs into one row-concatenated slab.

    Each member's rows are padded to a multiple of 8 (so every static slice starts on an
    aligned sublane offset) and columns to the widest member.  Returns the slab plus
    {name: (row_offset, rows, cols)} for static in-kernel views."""
    width = max(int(a.shape[1]) for _, a in entries)
    blocks, layout, off = [], {}, 0
    for name, a in entries:
        r, c = int(a.shape[0]), int(a.shape[1])
        rp = -(-r // 8) * 8
        blk = jnp.zeros((rp, width), jnp.float32).at[:r, :c].set(a.astype(jnp.float32))
        blocks.append(blk)
        layout[name] = (off, r, c)
        off += rp
    return jnp.concatenate(blocks, axis=0), layout


def prepare_inputs(p, cfg, bases):
    """Fold STFT bases into encoder/decoder convs, expand 1x1 convs block-diagonally over
    frequency, zero-pad the audio feature axis to 128 lanes, merge CAF gate/value projections
    (128-aligned), fold the frequency pool into the CAF-video projection, build block-diagonal
    (over sources) up/down-sampling matrices and the OLA weights, and pack all of it into
    4 row-concatenated VMEM slabs."""
    Ca, Cv, F = cfg["num_audio_channels"], cfg["num_video_channels"], cfg["n_freq"]
    n_fft, hop, Ns, Tv = cfg["n_fft"], cfg["hop_length"], cfg["n_samples"], cfg["video_frames"]
    c_src = cfg["c_sources"]
    T = (Ns - n_fft) // hop + 1          # real STFT frames (15)
    ta = T + 1                           # per-source frame rows, padded (16, power of two)
    FC = F * Ca                          # 36 real audio features per frame
    OUTW = ta * hop                      # 128 output samples per source (lane dense)
    fwd_basis, inv_basis = bases
    eye_f = jnp.eye(F, dtype=jnp.float32)

    def padc(w, cols):
        return jnp.zeros((w.shape[0], cols), jnp.float32).at[:, :w.shape[1]].set(w)

    def padr(w, rows):
        return jnp.zeros((rows, w.shape[1]), jnp.float32).at[:w.shape[0], :].set(w)

    def bd(wb):  # block-diagonal expansion over frequency bins (column order = f*C + c)
        w, b = wb
        return jnp.kron(eye_f, w), jnp.tile(b, F)[None, :]

    # encoder: a0[t, f*Ca+c] = sum_n frames[t,n] * Wenc[n, f*Ca+c] + benc   (lane padded)
    aenc_w, aenc_b = p["aenc"]
    fb = fwd_basis.reshape(n_fft, 2, F)
    wenc = padc(jnp.einsum("npf,pc->nfc", fb, aenc_w).reshape(n_fft, FC), FCP)
    benc = padc(jnp.tile(aenc_b, F)[None, :], FCP)

    # decoder: frames[t, n] = sum_{f,c} feat[t, f*Ca+c] * Wdec[f*Ca+c, n] + bdec (padded lanes)
    adec_w, adec_b = p["adec"]
    ib = inv_basis.reshape(2, F, n_fft)
    wdec = padr(padc(jnp.einsum("cp,pfn->fcn", adec_w, ib).reshape(FC, n_fft), OUTW), FCP)
    bdec = padc(jnp.einsum("p,pfn->n", adec_b, ib)[None, :], OUTW)

    wr1_, br1 = bd(p["rtfs1"])
    wr1 = padr(wr1_, FCP)
    wr2_, br2_ = bd(p["rtfs2"])
    wr2, br2 = padc(wr2_, FCP), padc(br2_, FCP)
    ws3_, bs3_ = bd(p["s3"])
    ws3, bs3 = padr(padc(ws3_, FCP), FCP), padc(bs3_, FCP)

    # CAF audio: merged gate|value projection; gate in cols [0,128), value in [128,256)
    caf_a_entries = []
    for i, ((wg, bg), (wv, bv)) in enumerate(p["caf_a"]):
        w = jnp.zeros((Cv, 2 * FCP), jnp.float32)
        w = w.at[:, :FC].set(jnp.tile(wg, (1, F))).at[:, FCP:FCP + FC].set(jnp.tile(wv, (1, F)))
        b = jnp.zeros((1, 2 * FCP), jnp.float32)
        b = b.at[0, :FC].set(jnp.tile(bg, F)).at[0, FCP:FCP + FC].set(jnp.tile(bv, F))
        caf_a_entries += [("wcafa%d" % i, w), ("bcafa%d" % i, b)]

    # CAF video: frequency mean-pool folded into the Ca->Cv projection (one matmul fewer)
    pool = padr(jnp.tile(jnp.eye(Ca, dtype=jnp.float32), (F, 1)) / F, FCP)      # (FCP, Ca)
    caf_v_entries = []
    for i, (wcv, bcv) in enumerate(p["caf_v"]):
        caf_v_entries += [("poolw%d" % i, pool @ wcv), ("bcafv%d" % i, bcv[None, :])]

    # nearest-neighbour time resampling, block-diagonal over sources (pad row maps to zero)
    up1 = jax.nn.one_hot((jnp.arange(ta) * Tv) // T, Tv, dtype=jnp.float32)     # (ta, Tv)
    dn1 = jax.nn.one_hot((jnp.arange(Tv) * T) // Tv, ta, dtype=jnp.float32)     # (Tv, ta)
    eye_s = jnp.eye(c_src, dtype=jnp.float32)
    up, dn = jnp.kron(eye_s, up1), jnp.kron(eye_s, dn1)

    # OLA weights: 1/overlap-count per (frame, in-frame sample); pad row and pad lanes zeroed
    t_grid = jnp.arange(ta)[:, None]
    n_grid = jnp.arange(OUTW)[None, :]
    m = t_grid * hop + n_grid
    count = jnp.where((m >= hop) & (m < OUTW - hop), 2.0, 1.0)
    wola1 = jnp.where((n_grid < n_fft) & (t_grid < T), 1.0 / count, 0.0)        # (ta, OUTW)
    wola = jnp.tile(wola1, (c_src, 1))                                          # (c_src*ta, OUTW)

    wvenc, bvenc = p["venc"]
    wvp1, bvp1 = p["vp1"]
    wvp2, bvp2 = p["vp2"]

    slab_a, la = _pack_rows([("wenc", wenc), ("benc", benc), ("wr2", wr2), ("br2", br2),
                             ("ws3", ws3), ("bs3", bs3), ("wdec", wdec), ("bdec", bdec),
                             ("wola", wola)])
    slab_h, lh = _pack_rows([("wr1", wr1), ("br1", br1)])
    slab_c, lc = _pack_rows(caf_a_entries)
    slab_v, lv = _pack_rows([("wvenc", wvenc), ("bvenc", bvenc[None, :]),
                             ("wvp1", wvp1), ("bvp1", bvp1[None, :]),
                             ("wvp2", wvp2), ("bvp2", bvp2[None, :]),
                             ("up", up), ("dn", dn)] + caf_v_entries)

    return (slab_a, slab_h, slab_c, slab_v), {"a": la, "h": lh, "c": lc, "v": lv}


# ----------------------------------------------------------------------------
# ARTFSNet forward: one pallas_call, grid over batch, sources batched into M
# ----------------------------------------------------------------------------
def artfs_forward(slabs, layouts, cfg, mixture, video):
    # mixture: (B, time); video: (B, c_sources, Tv, W, H)
    B, c_src, Tv, W, H = video.shape
    Ns = mixture.shape[-1]
    n_fft, hop = cfg["n_fft"], cfg["hop_length"]
    T = (Ns - n_fft) // hop + 1
    ta = T + 1
    assert n_fft == 2 * hop and Ns == ta * hop and (ta & (ta - 1)) == 0

    # static-reshape framing (50% overlap) + one zero pad frame per batch; no broadcast
    # over sources (the same mixture feeds every source of a batch).
    halves = mixture.reshape(B, Ns // hop, hop)
    frames = jnp.concatenate([halves[:, :-1], halves[:, 1:]], axis=-1)          # (B, T, n_fft)
    frames = jnp.concatenate([frames, jnp.zeros((B, 1, n_fft), frames.dtype)], axis=1)
    vid = video.reshape(B, c_src * Tv, W * H)

    slab_a, slab_h, slab_c, slab_v = slabs

    kernel = functools.partial(
        _artfs_kernel,
        la=layouts["a"], lh=layouts["h"], lc=layouts["c"], lv=layouts["v"],
        c_src=c_src, ta=ta, hop=hop, fcp=FCP,
        num_caf=cfg["num_caf_blocks"], num_rtfs=cfg["num_rtfs_blocks"])

    def slab_spec(arr):   # weights: full block, constant index -> resident in VMEM
        return pl.BlockSpec(arr.shape, lambda b: (0, 0))

    out = pl.pallas_call(
        kernel,
        out_shape=jax.ShapeDtypeStruct((B, c_src, ta * hop), jnp.float32),
        grid=(B,),
        in_specs=[
            pl.BlockSpec((1, ta, n_fft), lambda b: (b, 0, 0)),
            pl.BlockSpec((1, c_src * Tv, W * H), lambda b: (b, 0, 0)),
            slab_spec(slab_a), slab_spec(slab_h), slab_spec(slab_c), slab_spec(slab_v),
        ],
        out_specs=pl.BlockSpec((1, c_src, ta * hop), lambda b: (b, 0, 0)),
        compiler_params=pltpu.CompilerParams(dimension_semantics=("parallel",)),
    )(frames, vid, slab_a, slab_h, slab_c, slab_v)

    # (B, c_src, 128) is already the sample order -> (B, c_src, Ns)
    return {"preds": out}


# ----------------------------------------------------------------------------
# Main
# ----------------------------------------------------------------------------
if __name__ == "__main__":
    key = jax.random.PRNGKey(0)
    k_params, k_audio, k_video = jax.random.split(key, 3)

    params = init_params(k_params, CFG)
    bases = make_stft_bases(CFG)
    slabs, layouts = prepare_inputs(params, CFG, bases)

    B = CFG["batch"]
    mixture = jax.random.normal(k_audio, (B, CFG["n_samples"]), jnp.float32)
    video = jax.random.normal(
        k_video,
        (B, CFG["c_sources"], CFG["video_frames"], CFG["video_hw"], CFG["video_hw"]),
        jnp.float32,
    )

    run = jax.jit(lambda m, v: artfs_forward(slabs, layouts, CFG, m, v))
    out = run(mixture, video)
    preds = jax.block_until_ready(out["preds"])

    assert preds.shape == (B, CFG["c_sources"], CFG["n_samples"]), preds.shape
    assert bool(jnp.all(jnp.isfinite(preds)))
    print("KERNEL_OK")
</pallas_src>

<mosaic_0001>
module attributes {stable_mosaic.version = 11 : i64} {
  func.func @_artfs_kernel(%arg0: i32, %arg1: memref<1x16x16xf32, #tpu.memory_space<vmem>>, %arg2: memref<1x16x64xf32, #tpu.memory_space<vmem>>, %arg3: memref<480x128xf32, #tpu.memory_space<vmem>>, %arg4: memref<136x144xf32, #tpu.memory_space<vmem>>, %arg5: memref<48x256xf32, #tpu.memory_space<vmem>>, %arg6: memref<432x32xf32, #tpu.memory_space<vmem>>, %arg7: memref<1x2x128xf32, #tpu.memory_space<vmem>>) attributes {dimension_semantics = [#tpu.dimension_semantics<parallel>], iteration_bounds = array<i64: 2>, scalar_prefetch = 0 : i64, scratch_operands = 0 : i64, tpu.core_type = #tpu.core_type<tc>, window_params = [{transform_indices = @transform_0, window_bounds = array<i64: 1, 16, 16>}, {transform_indices = @transform_1, window_bounds = array<i64: 1, 16, 64>}, {pipeline_mode = #tpu.pipeline_mode<synchronous>, transform_indices = @transform_2, window_bounds = array<i64: 480, 128>}, {pipeline_mode = #tpu.pipeline_mode<synchronous>, transform_indices = @transform_3, window_bounds = array<i64: 136, 144>}, {pipeline_mode = #tpu.pipeline_mode<synchronous>, transform_indices = @transform_4, window_bounds = array<i64: 48, 256>}, {pipeline_mode = #tpu.pipeline_mode<synchronous>, transform_indices = @transform_5, window_bounds = array<i64: 432, 32>}, {transform_indices = @transform_6, window_bounds = array<i64: 1, 2, 128>}]} {
    %c0 = arith.constant 0 : index
    %c0_0 = arith.constant 0 : index
    %0 = vector.load %arg6[%c0, %c0_0] : memref<432x32xf32, #tpu.memory_space<vmem>>, vector<64x8xf32>
    %c64 = arith.constant 64 : index
    %c0_1 = arith.constant 0 : index
    %1 = vector.load %arg6[%c64, %c0_1] : memref<432x32xf32, #tpu.memory_space<vmem>>, vector<1x8xf32>
    %c72 = arith.constant 72 : index
    %c0_2 = arith.constant 0 : index
    %2 = vector.load %arg6[%c72, %c0_2] : memref<432x32xf32, #tpu.memory_space<vmem>>, vector<8x16xf32>
    %c80 = arith.constant 80 : index
    %c0_3 = arith.constant 0 : index
    %3 = vector.load %arg6[%c80, %c0_3] : memref<432x32xf32, #tpu.memory_space<vmem>>, vector<1x16xf32>
    %c88 = arith.constant 88 : index
    %c0_4 = arith.constant 0 : index
    %4 = vector.load %arg6[%c88, %c0_4] : memref<432x32xf32, #tpu.memory_space<vmem>>, vector<16x8xf32>
    %c104 = arith.constant 104 : index
    %c0_5 = arith.constant 0 : index
    %5 = vector.load %arg6[%c104, %c0_5] : memref<432x32xf32, #tpu.memory_space<vmem>>, vector<1x8xf32>
    %c112 = arith.constant 112 : index
    %c0_6 = arith.constant 0 : index
    %6 = vector.load %arg6[%c112, %c0_6] : memref<432x32xf32, #tpu.memory_space<vmem>>, vector<32x16xf32>
    %c144 = arith.constant 144 : index
    %c0_7 = arith.constant 0 : index
    %7 = vector.load %arg6[%c144, %c0_7] : memref<432x32xf32, #tpu.memory_space<vmem>>, vector<16x32xf32>
    %c160 = arith.constant 160 : index
    %c0_8 = arith.constant 0 : index
    %8 = vector.load %arg6[%c160, %c0_8] : memref<432x32xf32, #tpu.memory_space<vmem>>, vector<128x8xf32>
    %c296 = arith.constant 296 : index
    %c0_9 = arith.constant 0 : index
    %9 = vector.load %arg6[%c296, %c0_9] : memref<432x32xf32, #tpu.memory_space<vmem>>, vector<128x8xf32>
    %c288 = arith.constant 288 : index
    %c0_10 = arith.constant 0 : index
    %10 = vector.load %arg6[%c288, %c0_10] : memref<432x32xf32, #tpu.memory_space<vmem>>, vector<1x8xf32>
    %c424 = arith.constant 424 : index
    %c0_11 = arith.constant 0 : index
    %11 = vector.load %arg6[%c424, %c0_11] : memref<432x32xf32, #tpu.memory_space<vmem>>, vector<1x8xf32>
    %c0_12 = arith.constant 0 : index
    %c0_13 = arith.constant 0 : index
    %12 = vector.load %arg5[%c0_12, %c0_13] : memref<48x256xf32, #tpu.memory_space<vmem>>, vector<8x256xf32>
    %c16 = arith.constant 16 : index
    %c0_14 = arith.constant 0 : index
    %13 = vector.load %arg5[%c16, %c0_14] : memref<48x256xf32, #tpu.memory_space<vmem>>, vector<8x256xf32>
    %c32 = arith.constant 32 : index
    %c0_15 = arith.constant 0 : index
    %14 = vector.load %arg5[%c32, %c0_15] : memref<48x256xf32, #tpu.memory_space<vmem>>, vector<8x256xf32>
    %c8 = arith.constant 8 : index
    %c0_16 = arith.constant 0 : index
    %15 = vector.load %arg5[%c8, %c0_16] : memref<48x256xf32, #tpu.memory_space<vmem>>, vector<1x256xf32>
    %c24 = arith.constant 24 : index
    %c0_17 = arith.constant 0 : index
    %16 = vector.load %arg5[%c24, %c0_17] : memref<48x256xf32, #tpu.memory_space<vmem>>, vector<1x256xf32>
    %c40 = arith.constant 40 : index
    %c0_18 = arith.constant 0 : index
    %17 = vector.load %arg5[%c40, %c0_18] : memref<48x256xf32, #tpu.memory_space<vmem>>, vector<1x256xf32>
    %c0_19 = arith.constant 0 : index
    %c0_20 = arith.constant 0 : index
    %18 = vector.load %arg3[%c0_19, %c0_20] : memref<480x128xf32, #tpu.memory_space<vmem>>, vector<16x128xf32>
    %c16_21 = arith.constant 16 : index
    %c0_22 = arith.constant 0 : index
    %19 = vector.load %arg3[%c16_21, %c0_22] : memref<480x128xf32, #tpu.memory_space<vmem>>, vector<1x128xf32>
    %c24_23 = arith.constant 24 : index
    %c0_24 = arith.constant 0 : index
    %20 = vector.load %arg3[%c24_23, %c0_24] : memref<480x128xf32, #tpu.memory_space<vmem>>, vector<144x128xf32>
    %c168 = arith.constant 168 : index
    %c0_25 = arith.constant 0 : index
    %21 = vector.load %arg3[%c168, %c0_25] : memref<480x128xf32, #tpu.memory_space<vmem>>, vector<1x128xf32>
    %c176 = arith.constant 176 : index
    %c0_26 = arith.constant 0 : index
    %22 = vector.load %arg3[%c176, %c0_26] : memref<480x128xf32, #tpu.memory_space<vmem>>, vector<128x128xf32>
    %c304 = arith.constant 304 : index
    %c0_27 = arith.constant 0 : index
    %23 = vector.load %arg3[%c304, %c0_27] : memref<480x128xf32, #tpu.memory_space<vmem>>, vector<1x128xf32>
    %c312 = arith.constant 312 : index
    %c0_28 = arith.constant 0 : index
    %24 = vector.load %arg3[%c312, %c0_28] : memref<480x128xf32, #tpu.memory_space<vmem>>, vector<128x128xf32>
    %c440 = arith.constant 440 : index
    %c0_29 = arith.constant 0 : index
    %25 = vector.load %arg3[%c440, %c0_29] : memref<480x128xf32, #tpu.memory_space<vmem>>, vector<1x128xf32>
    %c448 = arith.constant 448 : index
    %c0_30 = arith.constant 0 : index
    %26 = vector.load %arg3[%c448, %c0_30] : memref<480x128xf32, #tpu.memory_space<vmem>>, vector<32x128xf32>
    %c0_31 = arith.constant 0 : index
    %c0_32 = arith.constant 0 : index
    %27 = vector.load %arg4[%c0_31, %c0_32] : memref<136x144xf32, #tpu.memory_space<vmem>>, vector<128x144xf32>
    %c128 = arith.constant 128 : index
    %c0_33 = arith.constant 0 : index
    %28 = vector.load %arg4[%c128, %c0_33] : memref<136x144xf32, #tpu.memory_space<vmem>>, vector<1x144xf32>
    %c0_34 = arith.constant 0 : index
    %c0_35 = arith.constant 0 : index
    %c0_36 = arith.constant 0 : index
    %29 = vector.load %arg1[%c0_34, %c0_35, %c0_36] : memref<1x16x16xf32, #tpu.memory_space<vmem>>, vector<1x16x16xf32>
    %30 = vector.shape_cast %29 : vector<1x16x16xf32> to vector<16x16xf32>
    %c0_37 = arith.constant 0 : index
    %c0_38 = arith.constant 0 : index
    %c0_39 = arith.constant 0 : index
    %31 = vector.load %arg2[%c0_37, %c0_38, %c0_39] : memref<1x16x64xf32, #tpu.memory_space<vmem>>, vector<1x16x64xf32>
    %32 = vector.shape_cast %31 : vector<1x16x64xf32> to vector<16x64xf32>
    %cst = arith.constant dense<0.000000e+00> : vector<16x8xf32>
    %33 = tpu.matmul %32, %0, %cst {dimension_numbers = #tpu.dot_dimension_numbers<[1], [0], [0], [1], [0, 0, 1, 1], [], []>} : vector<16x64xf32>, vector<64x8xf32>, vector<16x8xf32> -> vector<16x8xf32>
    %34 = vector.broadcast %1 : vector<1x8xf32> to vector<16x8xf32>
    %35 = arith.addf %33, %34 : vector<16x8xf32>
    %cst_40 = arith.constant 0.000000e+00 : f32
    %36 = vector.broadcast %cst_40 : f32 to vector<16x8xf32>
    %37 = arith.maximumf %35, %36 : vector<16x8xf32>
    %cst_41 = arith.constant dense<0.000000e+00> : vector<16x16xf32>
    %38 = tpu.matmul %37, %2, %cst_41 {dimension_numbers = #tpu.dot_dimension_numbers<[1], [0], [0], [1], [0, 0, 1, 1], [], []>} : vector<16x8xf32>, vector<8x16xf32>, vector<16x16xf32> -> vector<16x16xf32>
    %39 = vector.broadcast %3 : vector<1x16xf32> to vector<16x16xf32>
    %40 = arith.addf %38, %39 : vector<16x16xf32>
    %cst_42 = arith.constant 0.000000e+00 : f32
    %41 = vector.broadcast %cst_42 : f32 to vector<16x16xf32>
    %42 = arith.maximumf %40, %41 : vector<16x16xf32>
    %cst_43 = arith.constant dense<0.000000e+00> : vector<16x8xf32>
    %43 = tpu.matmul %42, %4, %cst_43 {dimension_numbers = #tpu.dot_dimension_numbers<[1], [0], [0], [1], [0, 0, 1, 1], [], []>} : vector<16x16xf32>, vector<16x8xf32>, vector<16x8xf32> -> vector<16x8xf32>
    %44 = vector.broadcast %5 : vector<1x8xf32> to vector<16x8xf32>
    %45 = arith.addf %43, %44 : vector<16x8xf32>
    %46 = arith.addf %37, %45 : vector<16x8xf32>
    %cst_44 = arith.constant dense<0.000000e+00> : vector<16x128xf32>
    %47 = tpu.matmul %30, %18, %cst_44 {dimension_numbers = #tpu.dot_dimension_numbers<[1], [0], [0], [1], [0, 0, 1, 1], [], []>} : vector<16x16xf32>, vector<16x128xf32>, vector<16x128xf32> -> vector<16x128xf32>
    %48 = vector.broadcast %19 : vector<1x128xf32> to vector<16x128xf32>
    %49 = arith.addf %47, %48 : vector<16x128xf32>
    %50 = tpu.concatenate %49, %49 in 0 : vector<16x128xf32>, vector<16x128xf32> -> vector<32x128xf32>
    %cst_45 = arith.constant dense<0.000000e+00> : vector<32x144xf32>
    %51 = tpu.matmul %50, %27, %cst_45 {dimension_numbers = #tpu.dot_dimension_numbers<[1], [0], [0], [1], [0, 0, 1, 1], [], []>} : vector<32x128xf32>, vector<128x144xf32>, vector<32x144xf32> -> vector<32x144xf32>
    %52 = vector.broadcast %28 : vector<1x144xf32> to vector<32x144xf32>
    %53 = arith.addf %51, %52 : vector<32x144xf32>
    %cst_46 = arith.constant 0.000000e+00 : f32
    %54 = vector.broadcast %cst_46 : f32 to vector<32x144xf32>
    %55 = arith.maximumf %53, %54 : vector<32x144xf32>
    %cst_47 = arith.constant dense<0.000000e+00> : vector<32x128xf32>
    %56 = tpu.matmul %55, %20, %cst_47 {dimension_numbers = #tpu.dot_dimension_numbers<[1], [0], [0], [1], [0, 0, 1, 1], [], []>} : vector<32x144xf32>, vector<144x128xf32>, vector<32x128xf32> -> vector<32x128xf32>
    %57 = vector.broadcast %21 : vector<1x128xf32> to vector<32x128xf32>
    %58 = arith.addf %56, %57 : vector<32x128xf32>
    %59 = arith.addf %50, %58 : vector<32x128xf32>
    %cst_48 = arith.constant dense<0.000000e+00> : vector<16x256xf32>
    %60 = tpu.matmul %46, %12, %cst_48 {dimension_numbers = #tpu.dot_dimension_numbers<[1], [0], [0], [1], [0, 0, 1, 1], [], []>} : vector<16x8xf32>, vector<8x256xf32>, vector<16x256xf32> -> vector<16x256xf32>
    %cst_49 = arith.constant dense<0.000000e+00> : vector<32x256xf32>
    %61 = tpu.matmul %6, %60, %cst_49 {dimension_numbers = #tpu.dot_dimension_numbers<[1], [0], [0], [1], [0, 0, 1, 1], [], []>} : vector<32x16xf32>, vector<16x256xf32>, vector<32x256xf32> -> vector<32x256xf32>
    %62 = vector.broadcast %15 : vector<1x256xf32> to vector<32x256xf32>
    %63 = arith.addf %61, %62 : vector<32x256xf32>
    %64 = vector.extract_strided_slice %63 {offsets = [0, 0], sizes = [32, 128], strides = [1, 1]} : vector<32x256xf32> to vector<32x128xf32>
    %65 = vector.extract_strided_slice %63 {offsets = [0, 128], sizes = [32, 128], strides = [1, 1]} : vector<32x256xf32> to vector<32x128xf32>
    %66 = arith.negf %64 : vector<32x128xf32>
    %67 = math.exp %66 : vector<32x128xf32>
    %cst_50 = arith.constant 1.000000e+00 : f32
    %68 = vector.broadcast %cst_50 : f32 to vector<32x128xf32>
    %69 = arith.addf %68, %67 : vector<32x128xf32>
    %70 = arith.divf %68, %69 : vector<32x128xf32>
    %71 = arith.mulf %59, %70 : vector<32x128xf32>
    %72 = arith.addf %59, %71 : vector<32x128xf32>
    %73 = arith.addf %72, %65 : vector<32x128xf32>
    %cst_51 = arith.constant dense<0.000000e+00> : vector<32x8xf32>
    %74 = tpu.matmul %59, %8, %cst_51 {dimension_numbers = #tpu.dot_dimension_numbers<[1], [0], [0], [1], [0, 0, 1, 1], [], []>} : vector<32x128xf32>, vector<128x8xf32>, vector<32x8xf32> -> vector<32x8xf32>
    %cst_52 = arith.constant dense<0.000000e+00> : vector<16x8xf32>
    %75 = tpu.matmul %7, %74, %cst_52 {dimension_numbers = #tpu.dot_dimension_numbers<[1], [0], [0], [1], [0, 0, 1, 1], [], []>} : vector<16x32xf32>, vector<32x8xf32>, vector<16x8xf32> -> vector<16x8xf32>
    %76 = vector.broadcast %10 : vector<1x8xf32> to vector<16x8xf32>
    %77 = arith.addf %75, %76 : vector<16x8xf32>
    %78 = arith.negf %77 : vector<16x8xf32>
    %79 = math.exp %78 : vector<16x8xf32>
    %cst_53 = arith.constant 1.000000e+00 : f32
    %80 = vector.broadcast %cst_53 : f32 to vector<16x8xf32>
    %81 = arith.addf %80, %79 : vector<16x8xf32>
    %82 = arith.divf %80, %81 : vector<16x8xf32>
    %83 = arith.mulf %46, %82 : vector<16x8xf32>
    %84 = arith.addf %46, %83 : vector<16x8xf32>
    %cst_54 = arith.constant dense<0.000000e+00> : vector<16x256xf32>
    %85 = tpu.matmul %84, %13, %cst_54 {dimension_numbers = #tpu.dot_dimension_numbers<[1], [0], [0], [1], [0, 0, 1, 1], [], []>} : vector<16x8xf32>, vector<8x256xf32>, vector<16x256xf32> -> vector<16x256xf32>
    %cst_55 = arith.constant dense<0.000000e+00> : vector<32x256xf32>
    %86 = tpu.matmul %6, %85, %cst_55 {dimension_numbers = #tpu.dot_dimension_numbers<[1], [0], [0], [1], [0, 0, 1, 1], [], []>} : vector<32x16xf32>, vector<16x256xf32>, vector<32x256xf32> -> vector<32x256xf32>
    %87 = vector.broadcast %16 : vector<1x256xf32> to vector<32x256xf32>
    %88 = arith.addf %86, %87 : vector<32x256xf32>
    %89 = vector.extract_strided_slice %88 {offsets = [0, 0], sizes = [32, 128], strides = [1, 1]} : vector<32x256xf32> to vector<32x128xf32>
    %90 = vector.extract_strided_slice %88 {offsets = [0, 128], sizes = [32, 128], strides = [1, 1]} : vector<32x256xf32> to vector<32x128xf32>
    %91 = arith.negf %89 : vector<32x128xf32>
    %92 = math.exp %91 : vector<32x128xf32>
    %cst_56 = arith.constant 1.000000e+00 : f32
    %93 = vector.broadcast %cst_56 : f32 to vector<32x128xf32>
    %94 = arith.addf %93, %92 : vector<32x128xf32>
    %95 = arith.divf %93, %94 : vector<32x128xf32>
    %96 = arith.mulf %73, %95 : vector<32x128xf32>
    %97 = arith.addf %73, %96 : vector<32x128xf32>
    %98 = arith.addf %97, %90 : vector<32x128xf32>
    %cst_57 = arith.constant dense<0.000000e+00> : vector<32x8xf32>
    %99 = tpu.matmul %73, %9, %cst_57 {dimension_numbers = #tpu.dot_dimension_numbers<[1], [0], [0], [1], [0, 0, 1, 1], [], []>} : vector<32x128xf32>, vector<128x8xf32>, vector<32x8xf32> -> vector<32x8xf32>
    %cst_58 = arith.constant dense<0.000000e+00> : vector<16x8xf32>
    %100 = tpu.matmul %7, %99, %cst_58 {dimension_numbers = #tpu.dot_dimension_numbers<[1], [0], [0], [1], [0, 0, 1, 1], [], []>} : vector<16x32xf32>, vector<32x8xf32>, vector<16x8xf32> -> vector<16x8xf32>
    %101 = vector.broadcast %11 : vector<1x8xf32> to vector<16x8xf32>
    %102 = arith.addf %100, %101 : vector<16x8xf32>
    %103 = arith.negf %102 : vector<16x8xf32>
    %104 = math.exp %103 : vector<16x8xf32>
    %cst_59 = arith.constant 1.000000e+00 : f32
    %105 = vector.broadcast %cst_59 : f32 to vector<16x8xf32>
    %106 = arith.addf %105, %104 : vector<16x8xf32>
    %107 = arith.divf %105, %106 : vector<16x8xf32>
    %108 = arith.mulf %84, %107 : vector<16x8xf32>
    %109 = arith.addf %84, %108 : vector<16x8xf32>
    %cst_60 = arith.constant dense<0.000000e+00> : vector<16x256xf32>
    %110 = tpu.matmul %109, %14, %cst_60 {dimension_numbers = #tpu.dot_dimension_numbers<[1], [0], [0], [1], [0, 0, 1, 1], [], []>} : vector<16x8xf32>, vector<8x256xf32>, vector<16x256xf32> -> vector<16x256xf32>
    %cst_61 = arith.constant dense<0.000000e+00> : vector<32x256xf32>
    %111 = tpu.matmul %6, %110, %cst_61 {dimension_numbers = #tpu.dot_dimension_numbers<[1], [0], [0], [1], [0, 0, 1, 1], [], []>} : vector<32x16xf32>, vector<16x256xf32>, vector<32x256xf32> -> vector<32x256xf32>
    %112 = vector.broadcast %17 : vector<1x256xf32> to vector<32x256xf32>
    %113 = arith.addf %111, %112 : vector<32x256xf32>
    %114 = vector.extract_strided_slice %113 {offsets = [0, 0], sizes = [32, 128], strides = [1, 1]} : vector<32x256xf32> to vector<32x128xf32>
    %115 = vector.extract_strided_slice %113 {offsets = [0, 128], sizes = [32, 128], strides = [1, 1]} : vector<32x256xf32> to vector<32x128xf32>
    %116 = arith.negf %114 : vector<32x128xf32>
    %117 = math.exp %116 : vector<32x128xf32>
    %cst_62 = arith.constant 1.000000e+00 : f32
    %118 = vector.broadcast %cst_62 : f32 to vector<32x128xf32>
    %119 = arith.addf %118, %117 : vector<32x128xf32>
    %120 = arith.divf %118, %119 : vector<32x128xf32>
    %121 = arith.mulf %98, %120 : vector<32x128xf32>
    %122 = arith.addf %98, %121 : vector<32x128xf32>
    %123 = arith.addf %122, %115 : vector<32x128xf32>
    %124 = arith.addf %50, %123 : vector<32x128xf32>
    %cst_63 = arith.constant dense<0.000000e+00> : vector<32x144xf32>
    %125 = tpu.matmul %124, %27, %cst_63 {dimension_numbers = #tpu.dot_dimension_numbers<[1], [0], [0], [1], [0, 0, 1, 1], [], []>} : vector<32x128xf32>, vector<128x144xf32>, vector<32x144xf32> -> vector<32x144xf32>
    %126 = vector.broadcast %28 : vector<1x144xf32> to vector<32x144xf32>
    %127 = arith.addf %125, %126 : vector<32x144xf32>
    %cst_64 = arith.constant 0.000000e+00 : f32
    %128 = vector.broadcast %cst_64 : f32 to vector<32x144xf32>
    %129 = arith.maximumf %127, %128 : vector<32x144xf32>
    %cst_65 = arith.constant dense<0.000000e+00> : vector<32x128xf32>
    %130 = tpu.matmul %129, %20, %cst_65 {dimension_numbers = #tpu.dot_dimension_numbers<[1], [0], [0], [1], [0, 0, 1, 1], [], []>} : vector<32x144xf32>, vector<144x128xf32>, vector<32x128xf32> -> vector<32x128xf32>
    %131 = vector.broadcast %21 : vector<1x128xf32> to vector<32x128xf32>
    %132 = arith.addf %130, %131 : vector<32x128xf32>
    %133 = arith.addf %124, %132 : vector<32x128xf32>
    %134 = arith.addf %50, %133 : vector<32x128xf32>
    %cst_66 = arith.constant dense<0.000000e+00> : vector<32x144xf32>
    %135 = tpu.matmul %134, %27, %cst_66 {dimension_numbers = #tpu.dot_dimension_numbers<[1], [0], [0], [1], [0, 0, 1, 1], [], []>} : vector<32x128xf32>, vector<128x144xf32>, vector<32x144xf32> -> vector<32x144xf32>
    %136 = vector.broadcast %28 : vector<1x144xf32> to vector<32x144xf32>
    %137 = arith.addf %135, %136 : vector<32x144xf32>
    %cst_67 = arith.constant 0.000000e+00 : f32
    %138 = vector.broadcast %cst_67 : f32 to vector<32x144xf32>
    %139 = arith.maximumf %137, %138 : vector<32x144xf32>
    %cst_68 = arith.constant dense<0.000000e+00> : vector<32x128xf32>
    %140 = tpu.matmul %139, %20, %cst_68 {dimension_numbers = #tpu.dot_dimension_numbers<[1], [0], [0], [1], [0, 0, 1, 1], [], []>} : vector<32x144xf32>, vector<144x128xf32>, vector<32x128xf32> -> vector<32x128xf32>
    %141 = vector.broadcast %21 : vector<1x128xf32> to vector<32x128xf32>
    %142 = arith.addf %140, %141 : vector<32x128xf32>
    %143 = arith.addf %134, %142 : vector<32x128xf32>
    %cst_69 = arith.constant dense<0.000000e+00> : vector<32x128xf32>
    %144 = tpu.matmul %143, %22, %cst_69 {dimension_numbers = #tpu.dot_dimension_numbers<[1], [0], [0], [1], [0, 0, 1, 1], [], []>} : vector<32x128xf32>, vector<128x128xf32>, vector<32x128xf32> -> vector<32x128xf32>
    %145 = vector.broadcast %23 : vector<1x128xf32> to vector<32x128xf32>
    %146 = arith.addf %144, %145 : vector<32x128xf32>
    %cst_70 = arith.constant 0.000000e+00 : f32
    %147 = vector.broadcast %cst_70 : f32 to vector<32x128xf32>
    %148 = arith.maximumf %146, %147 : vector<32x128xf32>
    %149 = arith.mulf %148, %50 : vector<32x128xf32>
    %cst_71 = arith.constant dense<0.000000e+00> : vector<32x128xf32>
    %150 = tpu.matmul %149, %24, %cst_71 {dimension_numbers = #tpu.dot_dimension_numbers<[1], [0], [0], [1], [0, 0, 1, 1], [], []>} : vector<32x128xf32>, vector<128x128xf32>, vector<32x128xf32> -> vector<32x128xf32>
    %151 = vector.broadcast %25 : vector<1x128xf32> to vector<32x128xf32>
    %152 = arith.addf %150, %151 : vector<32x128xf32>
    %153 = arith.mulf %152, %26 : vector<32x128xf32>
    %154 = tpu.iota {dimensions = array<i32: 0>} : vector<32x1xi32>
    %c15_i32 = arith.constant 15 : i32
    %155 = vector.broadcast %c15_i32 : i32 to vector<32x1xi32>
    %156 = arith.andi %154, %155 : vector<32x1xi32>
    %c0_i32 = arith.constant 0 : i32
    %157 = vector.broadcast %c0_i32 : i32 to vector<32x1xi32>
    %158 = arith.shrsi %156, %157 : vector<32x1xi32>
    %c1_i32 = arith.constant 1 : i32
    %159 = vector.broadcast %c1_i32 : i32 to vector<32x1xi32>
    %160 = arith.andi %158, %159 : vector<32x1xi32>
    %161 = arith.sitofp %160 : vector<32x1xi32> to vector<32x1xf32>
    %c8_i32 = arith.constant 8 : i32
    %162 = tpu.dynamic_rotate %153 by %c8_i32 dim 1 : vector<32x128xf32>, i32 -> vector<32x128xf32>
    %163 = arith.subf %162, %153 : vector<32x128xf32>
    %164 = vector.broadcast %161 : vector<32x1xf32> to vector<32x128xf32>
    %165 = arith.mulf %164, %163 : vector<32x128xf32>
    %166 = arith.addf %153, %165 : vector<32x128xf32>
    %c1_i32_72 = arith.constant 1 : i32
    %167 = vector.broadcast %c1_i32_72 : i32 to vector<32x1xi32>
    %168 = arith.shrsi %156, %167 : vector<32x1xi32>
    %c1_i32_73 = arith.constant 1 : i32
    %169 = vector.broadcast %c1_i32_73 : i32 to vector<32x1xi32>
    %170 = arith.andi %168, %169 : vector<32x1xi32>
    %171 = arith.sitofp %170 : vector<32x1xi32> to vector<32x1xf32>
    %c16_i32 = arith.constant 16 : i32
    %172 = tpu.dynamic_rotate %166 by %c16_i32 dim 1 : vector<32x128xf32>, i32 -> vector<32x128xf32>
    %173 = arith.subf %172, %166 : vector<32x128xf32>
    %174 = vector.broadcast %171 : vector<32x1xf32> to vector<32x128xf32>
    %175 = arith.mulf %174, %173 : vector<32x128xf32>
    %176 = arith.addf %166, %175 : vector<32x128xf32>
    %c2_i32 = arith.constant 2 : i32
    %177 = vector.broadcast %c2_i32 : i32 to vector<32x1xi32>
    %178 = arith.shrsi %156, %177 : vector<32x1xi32>
    %c1_i32_74 = arith.constant 1 : i32
    %179 = vector.broadcast %c1_i32_74 : i32 to vector<32x1xi32>
    %180 = arith.andi %178, %179 : vector<32x1xi32>
    %181 = arith.sitofp %180 : vector<32x1xi32> to vector<32x1xf32>
    %c32_i32 = arith.constant 32 : i32
    %182 = tpu.dynamic_rotate %176 by %c32_i32 dim 1 : vector<32x128xf32>, i32 -> vector<32x128xf32>
    %183 = arith.subf %182, %176 : vector<32x128xf32>
    %184 = vector.broadcast %181 : vector<32x1xf32> to vector<32x128xf32>
    %185 = arith.mulf %184, %183 : vector<32x128xf32>
    %186 = arith.addf %176, %185 : vector<32x128xf32>
    %c3_i32 = arith.constant 3 : i32
    %187 = vector.broadcast %c3_i32 : i32 to vector<32x1xi32>
    %188 = arith.shrsi %156, %187 : vector<32x1xi32>
    %c1_i32_75 = arith.constant 1 : i32
    %189 = vector.broadcast %c1_i32_75 : i32 to vector<32x1xi32>
    %190 = arith.andi %188, %189 : vector<32x1xi32>
    %191 = arith.sitofp %190 : vector<32x1xi32> to vector<32x1xf32>
    %c64_i32 = arith.constant 64 : i32
    %192 = tpu.dynamic_rotate %186 by %c64_i32 dim 1 : vector<32x128xf32>, i32 -> vector<32x128xf32>
    %193 = arith.subf %192, %186 : vector<32x128xf32>
    %194 = vector.broadcast %191 : vector<32x1xf32> to vector<32x128xf32>
    %195 = arith.mulf %194, %193 : vector<32x128xf32>
    %196 = arith.addf %186, %195 : vector<32x128xf32>
    %197 = vector.extract_strided_slice %196 {offsets = [0, 0], sizes = [16, 128], strides = [1, 1]} : vector<32x128xf32> to vector<16x128xf32>
    %cst_76 = arith.constant dense<0.000000e+00> : vector<128xf32>
    %198 = vector.multi_reduction <add>, %197, %cst_76 [0] : vector<16x128xf32> to vector<128xf32>
    %199 = vector.shape_cast %198 : vector<128xf32> to vector<1x128xf32>
    %200 = vector.extract_strided_slice %196 {offsets = [16, 0], sizes = [16, 128], strides = [1, 1]} : vector<32x128xf32> to vector<16x128xf32>
    %cst_77 = arith.constant dense<0.000000e+00> : vector<128xf32>
    %201 = vector.multi_reduction <add>, %200, %cst_77 [0] : vector<16x128xf32> to vector<128xf32>
    %202 = vector.shape_cast %201 : vector<128xf32> to vector<1x128xf32>
    %203 = tpu.concatenate %199, %202 in 0 : vector<1x128xf32>, vector<1x128xf32> -> vector<2x128xf32>
    %cst_78 = arith.constant dense<0.000000e+00> : vector<2xf32>
    %204 = vector.multi_reduction <add>, %203, %cst_78 [1] : vector<2x128xf32> to vector<2xf32>
    %205 = vector.shape_cast %204 : vector<2xf32> to vector<2x1xf32>
    %cst_79 = arith.constant 1.280000e+02 : f32
    %206 = vector.broadcast %cst_79 : f32 to vector<2x1xf32>
    %207 = arith.divf %205, %206 : vector<2x1xf32>
    %208 = vector.broadcast %207 : vector<2x1xf32> to vector<2x128xf32>
    %209 = arith.subf %203, %208 : vector<2x128xf32>
    %210 = math.absf %209 : vector<2x128xf32>
    %cst_80 = arith.constant dense<0xFF800000> : vector<2xf32>
    %211 = vector.multi_reduction <maximumf>, %210, %cst_80 [1] : vector<2x128xf32> to vector<2xf32>
    %212 = vector.shape_cast %211 : vector<2xf32> to vector<2x1xf32>
    %cst_81 = arith.constant 9.99999996E-13 : f32
    %213 = vector.broadcast %cst_81 : f32 to vector<2x1xf32>
    %214 = arith.maximumf %212, %213 : vector<2x1xf32>
    %215 = vector.broadcast %214 : vector<2x1xf32> to vector<2x128xf32>
    %216 = arith.divf %209, %215 : vector<2x128xf32>
    %c0_82 = arith.constant 0 : index
    %c0_83 = arith.constant 0 : index
    %c0_84 = arith.constant 0 : index
    %217 = vector.load %arg7[%c0_82, %c0_83, %c0_84] : memref<1x2x128xf32, #tpu.memory_space<vmem>>, vector<1x2x128xf32>
    %218 = vector.shape_cast %217 : vector<1x2x128xf32> to vector<2x128xf32>
    %219 = vector.shape_cast %216 : vector<2x128xf32> to vector<1x2x128xf32>
    tpu.vector_store %arg7[%c0_82, %c0_83, %c0_84], %219 {strides = array<i32>} : memref<1x2x128xf32, #tpu.memory_space<vmem>>, vector<1x2x128xf32>,
    return
  }
  func.func @transform_0(%arg0: i32) -> (i32, i32, i32) {
    %c0_i32 = arith.constant 0 : i32
    %c0_i32_0 = arith.constant 0 : i32
    %c0_i32_1 = arith.constant 0 : i32
    return %arg0, %c0_i32, %c0_i32_0 : i32, i32, i32
  }
  func.func @transform_1(%arg0: i32) -> (i32, i32, i32) {
    %c0_i32 = arith.constant 0 : i32
    %c0_i32_0 = arith.constant 0 : i32
    %c0_i32_1 = arith.constant 0 : i32
    return %arg0, %c0_i32, %c0_i32_0 : i32, i32, i32
  }
  func.func @transform_2(%arg0: i32) -> (i32, i32) {
    %c0_i32 = arith.constant 0 : i32
    %c0_i32_0 = arith.constant 0 : i32
    %c0_i32_1 = arith.constant 0 : i32
    return %c0_i32, %c0_i32_0 : i32, i32
  }
  func.func @transform_3(%arg0: i32) -> (i32, i32) {
    %c0_i32 = arith.constant 0 : i32
    %c0_i32_0 = arith.constant 0 : i32
    %c0_i32_1 = arith.constant 0 : i32
    return %c0_i32, %c0_i32_0 : i32, i32
  }
  func.func @transform_4(%arg0: i32) -> (i32, i32) {
    %c0_i32 = arith.constant 0 : i32
    %c0_i32_0 = arith.constant 0 : i32
    %c0_i32_1 = arith.constant 0 : i32
    return %c0_i32, %c0_i32_0 : i32, i32
  }
  func.func @transform_5(%arg0: i32) -> (i32, i32) {
    %c0_i32 = arith.constant 0 : i32
    %c0_i32_0 = arith.constant 0 : i32
    %c0_i32_1 = arith.constant 0 : i32
    return %c0_i32, %c0_i32_0 : i32, i32
  }
  func.func @transform_6(%arg0: i32) -> (i32, i32, i32) {
    %c0_i32 = arith.constant 0 : i32
    %c0_i32_0 = arith.constant 0 : i32
    %c0_i32_1 = arith.constant 0 : i32
    return %arg0, %c0_i32, %c0_i32_0 : i32, i32, i32
  }
}

</mosaic_0001>

<llo_original>
// kernel: _lambda_.1
$region0: #{_lambda_.1}
  #allocation0 [shape = 'u32[]', space=smem, size = 0x4, offset = 0x4, fixed_abs, tag = 'smem constant byte address 0x4 - core index']
  #allocation1 [shape = 'u32[72,128]{1,0:T(1,128)}', space=vmem, size = 0x9000, scoped, tag = 'internal scratch']
  %s0 = inlined_call_operand.vmem [shape: f32[2,16,16], index: 0, kind: input, shape index: {}]
  %s1 = inlined_call_operand.vmem [shape: f32[2,16,64], index: 1, kind: input, shape index: {}]
  %s2 = inlined_call_operand.hbm [shape: f32[480,128], index: 2, kind: input, shape index: {}]
  %s3 = inlined_call_operand.vmem [shape: f32[136,144], index: 3, kind: input, shape index: {}]
  %s4 = inlined_call_operand.hbm [shape: f32[48,256], index: 4, kind: input, shape index: {}]
  %s5 = inlined_call_operand.hbm [shape: f32[432,32], index: 5, kind: input, shape index: {}]
  %s6 = inlined_call_operand.hbm [shape: f32[2,2,128], index: 6, kind: output, shape index: {}]
  %s7 = sld [smem:[#allocation0]]
  $region69: #{_lambda_.1} parent=0
    _
  %s9 = ssub.s32 1, %s7
  %s10 = scalar_select 0, %s9, %s7
  $region1: #{_lambda_.1} parent=0
    #allocation2 [shape = 'u8[245760]{0}', space=vmem, size = 0x3c000, scoped, tag = 'input window, operand 2, single buffered']
    #allocation3 [shape = 's32[2]{0}', space=sflag, size = 0x8, scoped, tag = 'scoped memory for _lambda_.1']
    #allocation4 [shape = 's32[2]{0}', space=sflag, size = 0x8, scoped, tag = 'scoped memory for _lambda_.1']
    #allocation5 [shape = 'u8[49152]{0}', space=vmem, size = 0xc000, scoped, tag = 'input window, operand 4, single buffered']
    #allocation6 [shape = 's32[1]{0}', space=sflag, size = 0x4, scoped, tag = 'scoped memory for _lambda_.1']
    #allocation7 [shape = 'u8[221184]{0}', space=vmem, size = 0x36000, scoped, tag = 'input window, operand 5, single buffered']
    #allocation8 [shape = 'u8[2048]{0}', space=vmem, size = 0x800, scoped, tag = 'output window, operand 0']
    %11 = vsyncpa [#allocation3], 0
    %12 = vsyncpa [#allocation6], 0
    %13 = vsyncpa [#allocation4], 0
    %s14 = scalar_lea.sflag [#allocation4], 1
    %15 = vsyncpa %s14, 0
    loop: start=0, step=1, limit=4
    $region2: #{_lambda_.1} parent=1 // loop_pre_header
      _
    $region3: #{_lambda_.1} parent=1 // loop_header
      %s17 = sphi 0, %s21
      %p18 = scmp.ge.s32.totalorder %s17, 4
      %s27 = sphi 0, %s29
      %s30 = sphi 0, %s27
      %s31 = sphi 0, %s30
      %s47 = sphi 0, %s31
      %s53 = sphi 0, %s55
      %s56 = sphi 0, %s53
      %s57 = sphi 0, %s56
      %s73 = sphi 0, %s57
      %s77 = sphi 0, %s77
      %s79 = sphi 0, %s77
      %s80 = sphi 0, %s79
      %s94 = sphi 0, %s80
      %s98 = sphi 0, %s98
      %s100 = sphi 0, %s98
      %s101 = sphi 0, %s100
      %s115 = sphi 0, %s101
      %s119 = sphi 0, %s119
      %s121 = sphi 0, %s119
      %s122 = sphi 0, %s121
      %s136 = sphi 0, %s122
      %s140 = sphi 0, %s140
      %s142 = sphi 0, %s140
      %s143 = sphi 0, %s142
      %s157 = sphi 0, %s143
      %s163 = sphi 0, %s165
      %s166 = sphi 0, %s163
      %s167 = sphi 0, %s166
      %s183 = sphi 0, %s167
    $region4: #{_lambda_.1} parent=1 // loop_header_branch
      %20 = sbr.rel (%p18) target = $region8
    $region5: #{_lambda_.1} parent=1 // loop_body
      %s22 = ssub.s32 %s17, 1
      %s23 = ssub.s32 %s17, 2
      %s24 = sadd.s32 %s17, 1
      %s25 = ssub.s32 %s17, %s24
      %p26 = scmp.eq.s32.totalorder %s25, 0
      %s28 = sadd.s32 %s27, 1
      %s29 = scalar_select %p26, %s27, %s28
      %p32 = pneg %p26
      %p33 = scmp.eq.s32.totalorder %s17, 1
      %p34 = por %p32, %p33
      %p35 = scmp.ne.s32.totalorder %s27, %s30
      %p36 = scmp.eq.s32.totalorder %s17, 0
      %p37 = por %p35, %p36
      %p38 = scmp.ne.s32.totalorder %s27, %s30
      %p39 = scmp.eq.s32.totalorder %s22, 1
      %p40 = por %p38, %p39
      %p41 = scmp.ne.s32.totalorder %s30, %s31
      %p42 = scmp.eq.s32.totalorder %s22, 0
      %p43 = por %p41, %p42
      %p44 = scmp.ne.s32.totalorder %s30, %s31
      %p45 = scmp.eq.s32.totalorder %s23, 1
      %p46 = por %p44, %p45
      %p48 = scmp.ne.s32.totalorder %s31, %s47
      %p49 = scmp.eq.s32.totalorder %s23, 0
      %p50 = por %p48, %p49
      %s51 = ssub.s32 %s17, %s24
      %p52 = scmp.eq.s32.totalorder %s51, 0
      %s54 = sadd.s32 %s53, 1
      %s55 = scalar_select %p52, %s53, %s54
      %p58 = pneg %p52
      %p59 = scmp.eq.s32.totalorder %s17, 1
      %p60 = por %p58, %p59
      %p61 = scmp.ne.s32.totalorder %s53, %s56
      %p62 = scmp.eq.s32.totalorder %s17, 0
      %p63 = por %p61, %p62
      %p64 = scmp.ne.s32.totalorder %s53, %s56
      %p65 = scmp.eq.s32.totalorder %s22, 1
      %p66 = por %p64, %p65
      %p67 = scmp.ne.s32.totalorder %s56, %s57
      %p68 = scmp.eq.s32.totalorder %s22, 0
      %p69 = por %p67, %p68
      %p70 = scmp.ne.s32.totalorder %s56, %s57
      %p71 = scmp.eq.s32.totalorder %s23, 1
      %p72 = por %p70, %p71
      %p74 = scmp.ne.s32.totalorder %s57, %s73
      %p75 = scmp.eq.s32.totalorder %s23, 0
      %p76 = por %p74, %p75
      %s78 = sadd.s32 %s77, 1
      %p81 = scmp.eq.s32.totalorder %s17, 1
      %p82 = scmp.ne.s32.totalorder %s77, %s79
      %p83 = scmp.eq.s32.totalorder %s17, 0
      %p84 = por %p82, %p83
      %p85 = scmp.ne.s32.totalorder %s77, %s79
      %p86 = scmp.eq.s32.totalorder %s22, 1
      %p87 = por %p85, %p86
      %p88 = scmp.ne.s32.totalorder %s79, %s80
      %p89 = scmp.eq.s32.totalorder %s22, 0
      %p90 = por %p88, %p89
      %p91 = scmp.ne.s32.totalorder %s79, %s80
      %p92 = scmp.eq.s32.totalorder %s23, 1
      %p93 = por %p91, %p92
      %p95 = scmp.ne.s32.totalorder %s80, %s94
      %p96 = scmp.eq.s32.totalorder %s23, 0
      %p97 = por %p95, %p96
      %s99 = sadd.s32 %s98, 1
      %p102 = scmp.eq.s32.totalorder %s17, 1
      %p103 = scmp.ne.s32.totalorder %s98, %s100
      %p104 = scmp.eq.s32.totalorder %s17, 0
      %p105 = por %p103, %p104
      %p106 = scmp.ne.s32.totalorder %s98, %s100
      %p107 = scmp.eq.s32.totalorder %s22, 1
      %p108 = por %p106, %p107
      %p109 = scmp.ne.s32.totalorder %s100, %s101
      %p110 = scmp.eq.s32.totalorder %s22, 0
      %p111 = por %p109, %p110
      %p112 = scmp.ne.s32.totalorder %s100, %s101
      %p113 = scmp.eq.s32.totalorder %s23, 1
      %p114 = por %p112, %p113
      %p116 = scmp.ne.s32.totalorder %s101, %s115
      %p117 = scmp.eq.s32.totalorder %s23, 0
      %p118 = por %p116, %p117
      %s120 = sadd.s32 %s119, 1
      %p123 = scmp.eq.s32.totalorder %s17, 1
      %p124 = scmp.ne.s32.totalorder %s119, %s121
      %p125 = scmp.eq.s32.totalorder %s17, 0
      %p126 = por %p124, %p125
      %p127 = scmp.ne.s32.totalorder %s119, %s121
      %p128 = scmp.eq.s32.totalorder %s22, 1
      %p129 = por %p127, %p128
      %p130 = scmp.ne.s32.totalorder %s121, %s122
      %p131 = scmp.eq.s32.totalorder %s22, 0
      %p132 = por %p130, %p131
      %p133 = scmp.ne.s32.totalorder %s121, %s122
      %p134 = scmp.eq.s32.totalorder %s23, 1
      %p135 = por %p133, %p134
      %p137 = scmp.ne.s32.totalorder %s122, %s136
      %p138 = scmp.eq.s32.totalorder %s23, 0
      %p139 = por %p137, %p138
      %s141 = sadd.s32 %s140, 1
      %p144 = scmp.eq.s32.totalorder %s17, 1
      %p145 = scmp.ne.s32.totalorder %s140, %s142
      %p146 = scmp.eq.s32.totalorder %s17, 0
      %p147 = por %p145, %p146
      %p148 = scmp.ne.s32.totalorder %s140, %s142
      %p149 = scmp.eq.s32.totalorder %s22, 1
      %p150 = por %p148, %p149
      %p151 = scmp.ne.s32.totalorder %s142, %s143
      %p152 = scmp.eq.s32.totalorder %s22, 0
      %p153 = por %p151, %p152
      %p154 = scmp.ne.s32.totalorder %s142, %s143
      %p155 = scmp.eq.s32.totalorder %s23, 1
      %p156 = por %p154, %p155
      %p158 = scmp.ne.s32.totalorder %s143, %s157
      %p159 = scmp.eq.s32.totalorder %s23, 0
      %p160 = por %p158, %p159
      %s161 = ssub.s32 %s17, %s24
      %p162 = scmp.eq.s32.totalorder %s161, 0
      %s164 = sadd.s32 %s163, 1
      %s165 = scalar_select %p162, %s163, %s164
      %p168 = pneg %p162
      %p169 = scmp.eq.s32.totalorder %s17, 1
      %p170 = por %p168, %p169
      %p171 = scmp.ne.s32.totalorder %s163, %s166
      %p172 = scmp.eq.s32.totalorder %s17, 0
      %p173 = por %p171, %p172
      %p174 = scmp.ne.s32.totalorder %s163, %s166
      %p175 = scmp.eq.s32.totalorder %s22, 1
      %p176 = por %p174, %p175
      %p177 = scmp.ne.s32.totalorder %s166, %s167
      %p178 = scmp.eq.s32.totalorder %s22, 0
      %p179 = por %p177, %p178
      %p180 = scmp.ne.s32.totalorder %s166, %s167
      %p181 = scmp.eq.s32.totalorder %s23, 1
      %p182 = por %p180, %p181
      %p184 = scmp.ne.s32.totalorder %s167, %s183
      %p185 = scmp.eq.s32.totalorder %s23, 0
      %p186 = por %p184, %p185
      %p187 = scmp.le.s32.totalorder 1, %s17
      %p188 = scmp.lt.s32.totalorder %s17, 3
      %p189 = pnand %p187, %p188
      %p190 = pneg %p189
      // Predicated region
      $region9: #{_lambda_.1} parent=5 // pred_check
        _
      $region10: #{_lambda_.1} parent=5 // pred_check_branch
        %192 = sbr.rel (%p189) target = $region12
      $region11: #{_lambda_.1} parent=5 // pred_region
        %s193 = ssub.s32 %s17, 1
        // Predicated region
        $region13: #{_lambda_.1} parent=11 // pred_check
          %p194 = pneg %p90
        $region14: #{_lambda_.1} parent=11 // pred_check_branch
          %196 = sbr.rel (%p194) target = $region16
        $region15: #{_lambda_.1} parent=11 // pred_region
          %198 = vsyncadd [#allocation3], 0
          %s199 = sshll.u32 %s2, 4
          %s200 = int_to_ptr.hbm [resolvable:$true] %s199
          %s201 = sshll.u32 [#allocation2], 4
          %s202 = int_to_ptr.vmem [resolvable:$true] %s201
          %207 = dma.hbm_to_vmem [thread:$0]  %s200, 7680, %s202, [#allocation3], 128, 128, 8
        $region16: #{_lambda_.1} parent=11 // pred_fallthru
          _
        // Predicated region
        $region17: #{_lambda_.1} parent=11 // pred_check
          %p208 = pneg %p111
        $region18: #{_lambda_.1} parent=11 // pred_check_branch
          %210 = sbr.rel (%p208) target = $region20
        $region19: #{_lambda_.1} parent=11 // pred_region
          _
        $region20: #{_lambda_.1} parent=11 // pred_fallthru
          _
        // Predicated region
        $region21: #{_lambda_.1} parent=11 // pred_check
          %p211 = pneg %p132
        $region22: #{_lambda_.1} parent=11 // pred_check_branch
          %213 = sbr.rel (%p211) target = $region24
        $region23: #{_lambda_.1} parent=11 // pred_region
          %215 = vsyncadd [#allocation6], 0
          %s216 = sshll.u32 %s4, 4
          %s217 = int_to_ptr.hbm [resolvable:$true] %s216
          %s218 = sshll.u32 [#allocation5], 4
          %s219 = int_to_ptr.vmem [resolvable:$true] %s218
          %224 = dma.hbm_to_vmem [thread:$0]  %s217, 1536, %s219, [#allocation6], 256, 256, 16
        $region24: #{_lambda_.1} parent=11 // pred_fallthru
          _
        // Predicated region
        $region25: #{_lambda_.1} parent=11 // pred_check
          %p225 = pneg %p153
        $region26: #{_lambda_.1} parent=11 // pred_check_branch
          %227 = sbr.rel (%p225) target = $region28
        $region27: #{_lambda_.1} parent=11 // pred_region
          %229 = vsyncadd [#allocation6], 0
          %s230 = sshll.u32 %s5, 4
          %s231 = int_to_ptr.hbm [resolvable:$true] %s230
          %s232 = sshll.u32 [#allocation7], 4
          %s233 = int_to_ptr.vmem [resolvable:$true] %s232
          %238 = dma.hbm_to_vmem [thread:$0]  %s231, 6912, %s233, [#allocation6], 128, 128, 8
        $region28: #{_lambda_.1} parent=11 // pred_fallthru
          _
      $region12: #{_lambda_.1} parent=5 // pred_fallthru
        _
      %p239 = scmp.lt.s32.totalorder %s17, 2
      // Predicated region
      $region29: #{_lambda_.1} parent=5 // pred_check
        %p240 = pneg %p239
      $region30: #{_lambda_.1} parent=5 // pred_check_branch
        %242 = sbr.rel (%p240) target = $region32
      $region31: #{_lambda_.1} parent=5 // pred_region
        // Predicated region
        $region33: #{_lambda_.1} parent=31 // pred_check
          %p243 = pneg %p37
        $region34: #{_lambda_.1} parent=31 // pred_check_branch
          %245 = sbr.rel (%p243) target = $region36
        $region35: #{_lambda_.1} parent=31 // pred_region
          %p246 = scmp.lt.s32.totalorder %s17, 1
          %s247 = scalar_select %p246, %s17, 1
          %s248 = smul.addr %s247, 2
          %s249 = smul.addr %s248, 8
          %s250 = scalar_lea.vmem %s0, %s249
        $region36: #{_lambda_.1} parent=31 // pred_fallthru
          _
        // Predicated region
        $region37: #{_lambda_.1} parent=31 // pred_check
          %p251 = pneg %p63
        $region38: #{_lambda_.1} parent=31 // pred_check_branch
          %253 = sbr.rel (%p251) target = $region40
        $region39: #{_lambda_.1} parent=31 // pred_region
          %p254 = scmp.lt.s32.totalorder %s17, 1
          %s255 = scalar_select %p254, %s17, 1
          %s256 = smul.addr %s255, 2
          %s257 = smul.addr %s256, 8
          %s258 = scalar_lea.vmem %s1, %s257
        $region40: #{_lambda_.1} parent=31 // pred_fallthru
          _
      $region32: #{_lambda_.1} parent=5 // pred_fallthru
        _
      %p259 = scmp.le.s32.totalorder 1, %s17
      %p260 = scmp.lt.s32.totalorder %s17, 3
      %p261 = pnand %p259, %p260
      %p262 = pneg %p261
      // Predicated region
      $region41: #{_lambda_.1} parent=5 // pred_check
        _
      $region42: #{_lambda_.1} parent=5 // pred_check_branch
        %264 = sbr.rel (%p261) target = $region44
      $region43: #{_lambda_.1} parent=5 // pred_region
        %s265 = ssub.s32 %s17, 1
        // Predicated region
        $region45: #{_lambda_.1} parent=43 // pred_check
          %p266 = pneg %p90
        $region46: #{_lambda_.1} parent=43 // pred_check_branch
          %268 = sbr.rel (%p266) target = $region48
        $region47: #{_lambda_.1} parent=43 // pred_region
          %270 = dma.done [#allocation3], 7680
        $region48: #{_lambda_.1} parent=43 // pred_fallthru
          _
        // Predicated region
        $region49: #{_lambda_.1} parent=43 // pred_check
          %p271 = pneg %p132
        $region50: #{_lambda_.1} parent=43 // pred_check_branch
          %273 = sbr.rel (%p271) target = $region52
        $region51: #{_lambda_.1} parent=43 // pred_region
          %275 = dma.done [#allocation6], 1536
        $region52: #{_lambda_.1} parent=43 // pred_fallthru
          _
        // Predicated region
        $region53: #{_lambda_.1} parent=43 // pred_check
          %p276 = pneg %p153
        $region54: #{_lambda_.1} parent=43 // pred_check_branch
          %278 = sbr.rel (%p276) target = $region56
        $region55: #{_lambda_.1} parent=43 // pred_region
          %280 = dma.done [#allocation6], 6912
        $region56: #{_lambda_.1} parent=43 // pred_fallthru
          _
        %p281 = scmp.lt.s32.totalorder %s22, 1
        %s282 = scalar_select %p281, %s22, 1
        %s283 = smul.addr %s282, 2
        %s284 = smul.addr %s283, 8
        %s285 = scalar_lea.vmem %s0, %s284
        %p286 = pneg %p43
        %p287 = pneg %p40
        %p288 = scmp.lt.s32.totalorder %s22, 1
        %s289 = scalar_select %p288, %s22, 1
        %s290 = smul.addr %s289, 2
        %s291 = smul.addr %s290, 8
        %s292 = scalar_lea.vmem %s1, %s291
        %p293 = pneg %p69
        %p294 = pneg %p66
        %p295 = pneg %p90
        %p296 = pneg %p87
        %p297 = pneg %p111
        %p298 = pneg %p108
        %p299 = pneg %p132
        %p300 = pneg %p129
        %p301 = pneg %p153
        %p302 = pneg %p150
        %p303 = pneg %p179
        %p304 = pneg %p176
        %s305 = sand.u32 %s166, 1
        %s306 = scalar_lea.sflag [#allocation4], %s305
        %s307 = sand.u32 %s166, 1
        %s308 = smul.addr %s307, 2
        %s309 = scalar_lea.vmem [#allocation8], %s308
        %p310 = scmp.lt.s32.totalorder %s22, 1
        %s311 = scalar_select %p310, %s22, 1
        %s312 = smul.addr %s311, 2
        %s313 = smul.addr %s312, 8
        %s314 = scalar_lea.vmem %s0, %s313
        %p315 = scmp.lt.s32.totalorder %s22, 1
        %s316 = scalar_select %p315, %s22, 1
        %s317 = smul.addr %s316, 2
        %s318 = smul.addr %s317, 8
        %s319 = scalar_lea.vmem %s1, %s318
        %v320 = vld [vmem:[#allocation7] sm:$0xff]
        %v321 = vld [vmem:[#allocation7 + $0x8] sm:$0xff]
        %v322 = vld [vmem:[#allocation7 + $0x10] sm:$0xff]
        %v323 = vld [vmem:[#allocation7 + $0x18] sm:$0xff]
        %v324 = vld [vmem:[#allocation7 + $0x20] sm:$0xff]
        %v325 = vld [vmem:[#allocation7 + $0x28] sm:$0xff]
        %v326 = vld [vmem:[#allocation7 + $0x30] sm:$0xff]
        %v327 = vld [vmem:[#allocation7 + $0x38] sm:$0xff]
        %v328 = vld [vmem:[#allocation7 + $0x40] sm:$0x1]
        %v329 = vld [vmem:[#allocation7 + $0x48] sm:$0xff]
        %v330 = vld [vmem:[#allocation7 + $0x50] sm:$0x1]
        %v331 = vld [vmem:[#allocation7 + $0x58] sm:$0xff]
        %v332 = vld [vmem:[#allocation7 + $0x60] sm:$0xff]
        %v333 = vld [vmem:[#allocation7 + $0x68] sm:$0x1]
        %v334 = vld [vmem:[#allocation7 + $0x70] sm:$0xff]
        %v335 = vld [vmem:[#allocation7 + $0x78] sm:$0xff]
        %v336 = vld [vmem:[#allocation7 + $0x80] sm:$0xff]
        %v337 = vld [vmem:[#allocation7 + $0x88] sm:$0xff]
        %v338 = vld [vmem:[#allocation7 + $0x90] sm:$0xff]
        %v339 = vld [vmem:[#allocation7 + $0x98] sm:$0xff]
        %v340 = vld [vmem:[#allocation7 + $0xa0] sm:$0xff]
        %v341 = vld [vmem:[#allocation7 + $0xa8] sm:$0xff]
        %v342 = vld [vmem:[#allocation7 + $0xb0] sm:$0xff]
        %v343 = vld [vmem:[#allocation7 + $0xb8] sm:$0xff]
        %v344 = vld [vmem:[#allocation7 + $0xc0] sm:$0xff]
        %v345 = vld [vmem:[#allocation7 + $0xc8] sm:$0xff]
        %v346 = vld [vmem:[#allocation7 + $0xd0] sm:$0xff]
        %v347 = vld [vmem:[#allocation7 + $0xd8] sm:$0xff]
        %v348 = vld [vmem:[#allocation7 + $0xe0] sm:$0xff]
        %v349 = vld [vmem:[#allocation7 + $0xe8] sm:$0xff]
        %v350 = vld [vmem:[#allocation7 + $0xf0] sm:$0xff]
        %v351 = vld [vmem:[#allocation7 + $0xf8] sm:$0xff]
        %v352 = vld [vmem:[#allocation7 + $0x100] sm:$0xff]
        %v353 = vld [vmem:[#allocation7 + $0x108] sm:$0xff]
        %v354 = vld [vmem:[#allocation7 + $0x110] sm:$0xff]
        %v355 = vld [vmem:[#allocation7 + $0x118] sm:$0xff]
        %v356 = vld [vmem:[#allocation7 + $0x128] sm:$0xff]
        %v357 = vld [vmem:[#allocation7 + $0x130] sm:$0xff]
        %v358 = vld [vmem:[#allocation7 + $0x138] sm:$0xff]
        %v359 = vld [vmem:[#allocation7 + $0x140] sm:$0xff]
        %v360 = vld [vmem:[#allocation7 + $0x148] sm:$0xff]
        %v361 = vld [vmem:[#allocation7 + $0x150] sm:$0xff]
        %v362 = vld [vmem:[#allocation7 + $0x158] sm:$0xff]
        %v363 = vld [vmem:[#allocation7 + $0x160] sm:$0xff]
        %v364 = vld [vmem:[#allocation7 + $0x168] sm:$0xff]
        %v365 = vld [vmem:[#allocation7 + $0x170] sm:$0xff]
        %v366 = vld [vmem:[#allocation7 + $0x178] sm:$0xff]
        %v367 = vld [vmem:[#allocation7 + $0x180] sm:$0xff]
        %v368 = vld [vmem:[#allocation7 + $0x188] sm:$0xff]
        %v369 = vld [vmem:[#allocation7 + $0x190] sm:$0xff]
        %v370 = vld [vmem:[#allocation7 + $0x198] sm:$0xff]
        %v371 = vld [vmem:[#allocation7 + $0x1a0] sm:$0xff]
        %v372 = vld [vmem:[#allocation7 + $0x120] sm:$0x1]
        %v373 = vld [vmem:[#allocation7 + $0x1a8] sm:$0x1]
        %v374 = vld [vmem:[#allocation5] sm:$0xff]
        %v375 = vld [vmem:[#allocation5 + $0x8] sm:$0xff]
        %v376 = vld [vmem:[#allocation5 + $0x20] sm:$0xff]
        %v377 = vld [vmem:[#allocation5 + $0x28] sm:$0xff]
        %v378 = vld [vmem:[#allocation5 + $0x40] sm:$0xff]
        %v379 = vld [vmem:[#allocation5 + $0x48] sm:$0xff]
        %s380 = scalar_lea.vmem [#allocation5], 16
        %v381 = vld [vmem:[%s380] ss:$8 sm:$0x3]
        %s382 = scalar_lea.vmem [#allocation5], 48
        %v383 = vld [vmem:[%s382] ss:$8 sm:$0x3]
        %s384 = scalar_lea.vmem [#allocation5], 80
        %v385 = vld [vmem:[%s384] ss:$8 sm:$0x3]
        %v386 = vld [vmem:[#allocation2] sm:$0xff]
        %v387 = vld [vmem:[#allocation2 + $0x8] sm:$0xff]
        %v388 = vld [vmem:[#allocation2 + $0x10] sm:$0x1]
        %v389 = vld [vmem:[#allocation2 + $0x18] sm:$0xff]
        %v390 = vld [vmem:[#allocation2 + $0x20] sm:$0xff]
        %v391 = vld [vmem:[#allocation2 + $0x28] sm:$0xff]
        %v392 = vld [vmem:[#allocation2 + $0x30] sm:$0xff]
        %v393 = vld [vmem:[#allocation2 + $0x38] sm:$0xff]
        %v394 = vld [vmem:[#allocation2 + $0x40] sm:$0xff]
        %v395 = vld [vmem:[#allocation2 + $0x48] sm:$0xff]
        %v396 = vld [vmem:[#allocation2 + $0x50] sm:$0xff]
        %v397 = vld [vmem:[#allocation2 + $0x58] sm:$0xff]
        %v398 = vld [vmem:[#allocation2 + $0x60] sm:$0xff]
        %v399 = vld [vmem:[#allocation2 + $0x68] sm:$0xff]
        %v400 = vld [vmem:[#allocation2 + $0x70] sm:$0xff]
        %v401 = vld [vmem:[#allocation2 + $0x78] sm:$0xff]
        %v402 = vld [vmem:[#allocation2 + $0x80] sm:$0xff]
        %v403 = vld [vmem:[#allocation2 + $0x88] sm:$0xff]
        %v404 = vld [vmem:[#allocation2 + $0x90] sm:$0xff]
        %v405 = vld [vmem:[#allocation2 + $0x98] sm:$0xff]
        %v406 = vld [vmem:[#allocation2 + $0xa0] sm:$0xff]
        %v407 = vld [vmem:[#allocation2 + $0xa8] sm:$0x1]
        %v408 = vld [vmem:[#allocation2 + $0xb0] sm:$0xff]
        %v409 = vld [vmem:[#allocation2 + $0xb8] sm:$0xff]
        %v410 = vld [vmem:[#allocation2 + $0xc0] sm:$0xff]
        %v411 = vld [vmem:[#allocation2 + $0xc8] sm:$0xff]
        %v412 = vld [vmem:[#allocation2 + $0xd0] sm:$0xff]
        %v413 = vld [vmem:[#allocation2 + $0xd8] sm:$0xff]
        %v414 = vld [vmem:[#allocation2 + $0xe0] sm:$0xff]
        %v415 = vld [vmem:[#allocation2 + $0xe8] sm:$0xff]
        %v416 = vld [vmem:[#allocation2 + $0xf0] sm:$0xff]
        %v417 = vld [vmem:[#allocation2 + $0xf8] sm:$0xff]
        %v418 = vld [vmem:[#allocation2 + $0x100] sm:$0xff]
        %v419 = vld [vmem:[#allocation2 + $0x108] sm:$0xff]
        %v420 = vld [vmem:[#allocation2 + $0x110] sm:$0xff]
        %v421 = vld [vmem:[#allocation2 + $0x118] sm:$0xff]
        %v422 = vld [vmem:[#allocation2 + $0x120] sm:$0xff]
        %v423 = vld [vmem:[#allocation2 + $0x128] sm:$0xff]
        %v424 = vld [vmem:[#allocation2 + $0x130] sm:$0x1]
        %v425 = vld [vmem:[#allocation2 + $0x138] sm:$0xff]
        %v426 = vld [vmem:[#allocation2 + $0x140] sm:$0xff]
        %v427 = vld [vmem:[#allocation2 + $0x148] sm:$0xff]
        %v428 = vld [vmem:[#allocation2 + $0x150] sm:$0xff]
        %v429 = vld [vmem:[#allocation2 + $0x158] sm:$0xff]
        %v430 = vld [vmem:[#allocation2 + $0x160] sm:$0xff]
        %v431 = vld [vmem:[#allocation2 + $0x168] sm:$0xff]
        %v432 = vld [vmem:[#allocation2 + $0x170] sm:$0xff]
        %v433 = vld [vmem:[#allocation2 + $0x178] sm:$0xff]
        %v434 = vld [vmem:[#allocation2 + $0x180] sm:$0xff]
        %v435 = vld [vmem:[#allocation2 + $0x188] sm:$0xff]
        %v436 = vld [vmem:[#allocation2 + $0x190] sm:$0xff]
        %v437 = vld [vmem:[#allocation2 + $0x198] sm:$0xff]
        %v438 = vld [vmem:[#allocation2 + $0x1a0] sm:$0xff]
        %v439 = vld [vmem:[#allocation2 + $0x1a8] sm:$0xff]
        %v440 = vld [vmem:[#allocation2 + $0x1b0] sm:$0xff]
        %v441 = vld [vmem:[#allocation2 + $0x1b8] sm:$0x1]
        %v442 = vld [vmem:[#allocation2 + $0x1c0] sm:$0xff]
        %v443 = vld [vmem:[#allocation2 + $0x1c8] sm:$0xff]
        %v444 = vld [vmem:[#allocation2 + $0x1d0] sm:$0xff]
        %v445 = vld [vmem:[#allocation2 + $0x1d8] sm:$0xff]
        %v446 = vld [vmem:[%s3] sm:$0xff]
        %v447 = vld [vmem:[%s3 + $0x8] sm:$0xff]
        %v448 = vld [vmem:[%s3 + $0x10] sm:$0xff]
        %v449 = vld [vmem:[%s3 + $0x18] sm:$0xff]
        %v450 = vld [vmem:[%s3 + $0x20] sm:$0xff]
        %v451 = vld [vmem:[%s3 + $0x28] sm:$0xff]
        %v452 = vld [vmem:[%s3 + $0x30] sm:$0xff]
        %v453 = vld [vmem:[%s3 + $0x38] sm:$0xff]
        %v454 = vld [vmem:[%s3 + $0x40] sm:$0xff]
        %v455 = vld [vmem:[%s3 + $0x48] sm:$0xff]
        %v456 = vld [vmem:[%s3 + $0x50] sm:$0xff]
        %v457 = vld [vmem:[%s3 + $0x58] sm:$0xff]
        %v458 = vld [vmem:[%s3 + $0x60] sm:$0xff]
        %v459 = vld [vmem:[%s3 + $0x68] sm:$0xff]
        %v460 = vld [vmem:[%s3 + $0x70] sm:$0xff]
        %v461 = vld [vmem:[%s3 + $0x78] sm:$0xff]
        %v462 = vld [vmem:[%s3 + $0x80] sm:$0xff]
        %v463 = vld [vmem:[%s3 + $0x88] sm:$0xff]
        %v464 = vld [vmem:[%s3 + $0x90] sm:$0xff]
        %v465 = vld [vmem:[%s3 + $0x98] sm:$0xff]
        %v466 = vld [vmem:[%s3 + $0xa0] sm:$0xff]
        %v467 = vld [vmem:[%s3 + $0xa8] sm:$0xff]
        %v468 = vld [vmem:[%s3 + $0xb0] sm:$0xff]
        %v469 = vld [vmem:[%s3 + $0xb8] sm:$0xff]
        %v470 = vld [vmem:[%s3 + $0xc0] sm:$0xff]
        %v471 = vld [vmem:[%s3 + $0xc8] sm:$0xff]
        %v472 = vld [vmem:[%s3 + $0xd0] sm:$0xff]
        %v473 = vld [vmem:[%s3 + $0xd8] sm:$0xff]
        %v474 = vld [vmem:[%s3 + $0xe0] sm:$0xff]
        %v475 = vld [vmem:[%s3 + $0xe8] sm:$0xff]
        %v476 = vld [vmem:[%s3 + $0xf0] sm:$0xff]
        %v477 = vld [vmem:[%s3 + $0xf8] sm:$0xff]
        %s478 = scalar_lea.vmem %s3, 256
        %v479 = vld [vmem:[%s478] ss:$8 sm:$0x3]
        %v480 = vld [vmem:[%s314] sm:$0xff]
        %v481 = vld [vmem:[%s314 + $0x8] sm:$0xff]
        %v482 = vld [vmem:[%s319] sm:$0xff]
        %v483 = vld [vmem:[%s319 + $0x8] sm:$0xff]
        %v484 = vperm.slane %v328, 0
        %vm485 = vcmask 523264
        %v487 = vsel %vm485, %v482, 0
        %v490 = vsel %vm485, %v483, 0
        %492 = vmatpush.msra.mxu0 0.0
        %493 = vmatpush.msra.mxu0 0.0
        %494 = vmatpush.msra.mxu0 0.0
        %495 = vmatpush.msra.mxu0 0.0
        %496 = vmatpush.msra.mxu0 0.0
        %497 = vmatpush.msra.mxu0 0.0
        %498 = vmatpush.msra.mxu0 0.0
        %499 = vmatpush.msra.mxu0 0.0
        %500 = vmatpush.msra.mxu0 %v327
        %501 = vmatpush.msra.mxu0 %v326
        %502 = vmatpush.msra.mxu0 %v325
        %503 = vmatpush.msra.mxu0 %v324
        %504 = vmatpush.msra.mxu0 %v323
        %505 = vmatpush.msra.mxu0 %v322
        %506 = vmatpush.msra.mxu0 %v321
        %507 = vmatpush.msra.mxu0 %v320
        %508 = vmatmul.f32.gmra.mxu0 %v487
        %v509 = vpop.f32.mrf.mxu0
        %v510 = vadd.f32 %v484, %v509
        %511 = vmatmul.f32.gmra.mxu0 %v490
        %v512 = vpop.f32.mrf.mxu0
        %v513 = vadd.f32 %v484, %v512
        %514 = vdwg.mxu0
        %v515 = vmax.f32 %v510, 0.0
        %v516 = vmax.f32 %v513, 0.0
        %v517 = vperm.slane %v330, 0
        %vm518 = vcmask 64512
        %v520 = vsel %vm518, %v515, 0
        %v523 = vsel %vm518, %v516, 0
        %525 = vmatpush.msra.mxu0 0.0
        %526 = vmatpush.msra.mxu0 0.0
        %527 = vmatpush.msra.mxu0 0.0
        %528 = vmatpush.msra.mxu0 0.0
        %529 = vmatpush.msra.mxu0 0.0
        %530 = vmatpush.msra.mxu0 0.0
        %531 = vmatpush.msra.mxu0 0.0
        %532 = vmatpush.msra.mxu0 0.0
        %533 = vmatpush.msra.mxu0 0.0
        %534 = vmatpush.msra.mxu0 0.0
        %535 = vmatpush.msra.mxu0 0.0
        %536 = vmatpush.msra.mxu0 0.0
        %537 = vmatpush.msra.mxu0 0.0
        %538 = vmatpush.msra.mxu0 0.0
        %539 = vmatpush.msra.mxu0 0.0
        %540 = vmatpush.msra.mxu0 %v329
        %541 = vmatmul.f32.gmra.mxu0 %v520
        %v542 = vpop.f32.mrf.mxu0
        %v543 = vadd.f32 %v517, %v542
        %544 = vmatmul.f32.gmra.mxu0 %v523
        %v545 = vpop.f32.mrf.mxu0
        %v546 = vadd.f32 %v517, %v545
        %547 = vdwg.mxu0
        %v548 = vmax.f32 %v543, 0.0
        %v549 = vmax.f32 %v546, 0.0
        %v550 = vperm.slane %v333, 0
        %vm551 = vcmask 130048
        %v553 = vsel %vm551, %v548, 0
        %v556 = vsel %vm551, %v549, 0
        %558 = vmatpush.msra.mxu0 0.0
        %559 = vmatpush.msra.mxu0 0.0
        %560 = vmatpush.msra.mxu0 0.0
        %561 = vmatpush.msra.mxu0 0.0
        %562 = vmatpush.msra.mxu0 0.0
        %563 = vmatpush.msra.mxu0 0.0
        %564 = vmatpush.msra.mxu0 0.0
        %565 = vmatpush.msra.mxu0 0.0
        %566 = vmatpush.msra.mxu0 0.0
        %567 = vmatpush.msra.mxu0 0.0
        %568 = vmatpush.msra.mxu0 0.0
        %569 = vmatpush.msra.mxu0 0.0
        %570 = vmatpush.msra.mxu0 0.0
        %571 = vmatpush.msra.mxu0 0.0
        %572 = vmatpush.msra.mxu0 %v332
        %573 = vmatpush.msra.mxu0 %v331
        %574 = vmatmul.f32.gmra.mxu0 %v553
        %v575 = vpop.f32.mrf.mxu0
        %v576 = vadd.f32 %v550, %v575
        %577 = vmatmul.f32.gmra.mxu0 %v556
        %v578 = vpop.f32.mrf.mxu0
        %v579 = vadd.f32 %v550, %v578
        %580 = vdwg.mxu0
        %v581 = vadd.f32 %v515, %v576
        %v582 = vadd.f32 %v516, %v579
        %v583 = vperm.slane %v388, 0
        %v585 = vsel %vm551, %v480, 0
        %v588 = vsel %vm551, %v481, 0
        %590 = vmatpush.msra.mxu0 0.0
        %591 = vmatpush.msra.mxu0 0.0
        %592 = vmatpush.msra.mxu0 0.0
        %593 = vmatpush.msra.mxu0 0.0
        %594 = vmatpush.msra.mxu0 0.0
        %595 = vmatpush.msra.mxu0 0.0
        %596 = vmatpush.msra.mxu0 0.0
        %597 = vmatpush.msra.mxu0 0.0
        %598 = vmatpush.msra.mxu0 0.0
        %599 = vmatpush.msra.mxu0 0.0
        %600 = vmatpush.msra.mxu0 0.0
        %601 = vmatpush.msra.mxu0 0.0
        %602 = vmatpush.msra.mxu0 0.0
        %603 = vmatpush.msra.mxu0 0.0
        %604 = vmatpush.msra.mxu0 %v387
        %605 = vmatpush.msra.mxu0 %v386
        %606 = vmatmul.f32.gmra.mxu0 %v585
        %v607 = vpop.f32.mrf.mxu0
        %v608 = vadd.f32 %v583, %v607
        %609 = vmatmul.f32.gmra.mxu0 %v588
        %v610 = vpop.f32.mrf.mxu0
        %v611 = vadd.f32 %v583, %v610
        %612 = vdwg.mxu0
        %v614 = vperm.slane %v479, 0
        %v615 = vperm.slane %v479, 1
        %618 = vmatpush.msra.mxu0 %v476
        %619 = vmatpush.msra.mxu0 %v474
        %620 = vmatpush.msra.mxu0 %v472
        %621 = vmatpush.msra.mxu0 %v470
        %622 = vmatpush.msra.mxu0 %v468
        %623 = vmatpush.msra.mxu0 %v466
        %624 = vmatpush.msra.mxu0 %v464
        %625 = vmatpush.msra.mxu0 %v462
        %626 = vmatpush.msra.mxu0 %v460
        %627 = vmatpush.msra.mxu0 %v458
        %628 = vmatpush.msra.mxu0 %v456
        %629 = vmatpush.msra.mxu0 %v454
        %630 = vmatpush.msra.mxu0 %v452
        %631 = vmatpush.msra.mxu0 %v450
        %632 = vmatpush.msra.mxu0 %v448
        %633 = vmatpush.msra.mxu0 %v446
        %634 = vmatmul.f32.gmra.mxu0 %v608
        %v635 = vpop.f32.mrf.mxu0
        %v636 = vadd.f32 %v614, %v635
        %637 = vmatmul.f32.gmra.mxu0 %v611
        %v638 = vpop.f32.mrf.mxu0
        %v639 = vadd.f32 %v614, %v638
        %640 = vmatmul.f32.gmra.mxu0 %v608
        %v641 = vpop.f32.mrf.mxu0
        %v642 = vadd.f32 %v614, %v641
        %643 = vmatmul.f32.gmra.mxu0 %v611
        %v644 = vpop.f32.mrf.mxu0
        %v645 = vadd.f32 %v614, %v644
        %646 = vdwg.mxu0
        %647 = vmatpush.msra.mxu0 %v477
        %648 = vmatpush.msra.mxu0 %v475
        %649 = vmatpush.msra.mxu0 %v473
        %650 = vmatpush.msra.mxu0 %v471
        %651 = vmatpush.msra.mxu0 %v469
        %652 = vmatpush.msra.mxu0 %v467
        %653 = vmatpush.msra.mxu0 %v465
        %654 = vmatpush.msra.mxu0 %v463
        %655 = vmatpush.msra.mxu0 %v461
        %656 = vmatpush.msra.mxu0 %v459
        %657 = vmatpush.msra.mxu0 %v457
        %658 = vmatpush.msra.mxu0 %v455
        %659 = vmatpush.msra.mxu0 %v453
        %660 = vmatpush.msra.mxu0 %v451
        %661 = vmatpush.msra.mxu0 %v449
        %662 = vmatpush.msra.mxu0 %v447
        %663 = vmatmul.f32.gmra.mxu0 %v608
        %v664 = vpop.f32.mrf.mxu0
        %v665 = vadd.f32 %v615, %v664
        %666 = vmatmul.f32.gmra.mxu0 %v611
        %v667 = vpop.f32.mrf.mxu0
        %v668 = vadd.f32 %v615, %v667
        %669 = vmatmul.f32.gmra.mxu0 %v608
        %v670 = vpop.f32.mrf.mxu0
        %v671 = vadd.f32 %v615, %v670
        %672 = vmatmul.f32.gmra.mxu0 %v611
        %v673 = vpop.f32.mrf.mxu0
        %v674 = vadd.f32 %v615, %v673
        %675 = vdwg.mxu0
        %v676 = vmax.f32 %v636, 0.0
        %v677 = vmax.f32 %v665, 0.0
        %v678 = vmax.f32 %v639, 0.0
        %v679 = vmax.f32 %v668, 0.0
        %v680 = vmax.f32 %v642, 0.0
        %v681 = vmax.f32 %v671, 0.0
        %v682 = vmax.f32 %v645, 0.0
        %v683 = vmax.f32 %v674, 0.0
        %v684 = vperm.slane %v407, 0
        %v686 = vsel %vm551, %v677, 0
        %v689 = vsel %vm551, %v679, 0
        %v692 = vsel %vm551, %v681, 0
        %v695 = vsel %vm551, %v683, 0
        %697 = vmatpush.msra.mxu0 %v404
        %698 = vmatpush.msra.mxu0 %v403
        %699 = vmatpush.msra.mxu0 %v402
        %700 = vmatpush.msra.mxu0 %v401
        %701 = vmatpush.msra.mxu0 %v400
        %702 = vmatpush.msra.mxu0 %v399
        %703 = vmatpush.msra.mxu0 %v398
        %704 = vmatpush.msra.mxu0 %v397
        %705 = vmatpush.msra.mxu0 %v396
        %706 = vmatpush.msra.mxu0 %v395
        %707 = vmatpush.msra.mxu0 %v394
        %708 = vmatpush.msra.mxu0 %v393
        %709 = vmatpush.msra.mxu0 %v392
        %710 = vmatpush.msra.mxu0 %v391
        %711 = vmatpush.msra.mxu0 %v390
        %712 = vmatpush.msra.mxu0 %v389
        %713 = vmatmul.f32.gmra.mxu0 %v676
        %v714 = vpop.f32.mrf.mxu0
        %v715 = vadd.f32 %v684, %v714
        %716 = vmatmul.f32.gmra.mxu0 %v678
        %v717 = vpop.f32.mrf.mxu0
        %v718 = vadd.f32 %v684, %v717
        %719 = vmatmul.f32.gmra.mxu0 %v680
        %v720 = vpop.f32.mrf.mxu0
        %v721 = vadd.f32 %v684, %v720
        %722 = vmatmul.f32.gmra.mxu0 %v682
        %v723 = vpop.f32.mrf.mxu0
        %v724 = vadd.f32 %v684, %v723
        %725 = vdwg.mxu0
        %726 = vmatpush.msra.mxu0 0.0
        %727 = vmatpush.msra.mxu0 0.0
        %728 = vmatpush.msra.mxu0 0.0
        %729 = vmatpush.msra.mxu0 0.0
        %730 = vmatpush.msra.mxu0 0.0
        %731 = vmatpush.msra.mxu0 0.0
        %732 = vmatpush.msra.mxu0 0.0
        %733 = vmatpush.msra.mxu0 0.0
        %734 = vmatpush.msra.mxu0 0.0
        %735 = vmatpush.msra.mxu0 0.0
        %736 = vmatpush.msra.mxu0 0.0
        %737 = vmatpush.msra.mxu0 0.0
        %738 = vmatpush.msra.mxu0 0.0
        %739 = vmatpush.msra.mxu0 0.0
        %740 = vmatpush.msra.mxu0 %v406
        %741 = vmatpush.msra.mxu0 %v405
        %742 = vmatmul.f32.gmra.mxu0 %v686
        %v743 = vpop.f32.mrf.mxu0
        %v744 = vadd.f32 %v715, %v743
        %745 = vmatmul.f32.gmra.mxu0 %v689
        %v746 = vpop.f32.mrf.mxu0
        %v747 = vadd.f32 %v718, %v746
        %748 = vmatmul.f32.gmra.mxu0 %v692
        %v749 = vpop.f32.mrf.mxu0
        %v750 = vadd.f32 %v721, %v749
        %751 = vmatmul.f32.gmra.mxu0 %v695
        %v752 = vpop.f32.mrf.mxu0
        %v753 = vadd.f32 %v724, %v752
        %754 = vdwg.mxu0
        %v755 = vadd.f32 %v608, %v744
        %v756 = vadd.f32 %v611, %v747
        %v757 = vadd.f32 %v608, %v750
        %v758 = vadd.f32 %v611, %v753
        %v760 = vsel %vm518, %v581, 0
        %v763 = vsel %vm518, %v582, 0
        %765 = vmatpush.msra.mxu0 0.0
        %766 = vmatpush.msra.mxu0 0.0
        %767 = vmatpush.msra.mxu0 0.0
        %768 = vmatpush.msra.mxu0 0.0
        %769 = vmatpush.msra.mxu0 0.0
        %770 = vmatpush.msra.mxu0 0.0
        %771 = vmatpush.msra.mxu0 0.0
        %772 = vmatpush.msra.mxu0 0.0
        %773 = vmatpush.msra.mxu0 0.0
        %774 = vmatpush.msra.mxu0 0.0
        %775 = vmatpush.msra.mxu0 0.0
        %776 = vmatpush.msra.mxu0 0.0
        %777 = vmatpush.msra.mxu0 0.0
        %778 = vmatpush.msra.mxu0 0.0
        %779 = vmatpush.msra.mxu0 0.0
        %780 = vmatpush.msra.mxu0 %v374
        %781 = vmatmul.f32.gmra.mxu0 %v760
        %v782 = vpop.f32.mrf.mxu0
        %v783 = vadd.f32 0.0, %v782
        %784 = vmatmul.f32.gmra.mxu0 %v763
        %v785 = vpop.f32.mrf.mxu0
        %v786 = vadd.f32 0.0, %v785
        %787 = vdwg.mxu0
        %788 = vmatpush.msra.mxu0 0.0
        %789 = vmatpush.msra.mxu0 0.0
        %790 = vmatpush.msra.mxu0 0.0
        %791 = vmatpush.msra.mxu0 0.0
        %792 = vmatpush.msra.mxu0 0.0
        %793 = vmatpush.msra.mxu0 0.0
        %794 = vmatpush.msra.mxu0 0.0
        %795 = vmatpush.msra.mxu0 0.0
        %796 = vmatpush.msra.mxu0 0.0
        %797 = vmatpush.msra.mxu0 0.0
        %798 = vmatpush.msra.mxu0 0.0
        %799 = vmatpush.msra.mxu0 0.0
        %800 = vmatpush.msra.mxu0 0.0
        %801 = vmatpush.msra.mxu0 0.0
        %802 = vmatpush.msra.mxu0 0.0
        %803 = vmatpush.msra.mxu0 %v375
        %804 = vmatmul.f32.gmra.mxu0 %v760
        %v805 = vpop.f32.mrf.mxu0
        %v806 = vadd.f32 0.0, %v805
        %807 = vmatmul.f32.gmra.mxu0 %v763
        %v808 = vpop.f32.mrf.mxu0
        %v809 = vadd.f32 0.0, %v808
        %810 = vdwg.mxu0
        %v812 = vperm.slane %v381, 0
        %v813 = vperm.slane %v381, 1
        %v817 = vsel %vm551, %v334, 0
        %v820 = vsel %vm551, %v335, 0
        %v823 = vsel %vm551, %v336, 0
        %v826 = vsel %vm551, %v337, 0
        %828 = vmatpush.msra.mxu0 0.0
        %829 = vmatpush.msra.mxu0 0.0
        %830 = vmatpush.msra.mxu0 0.0
        %831 = vmatpush.msra.mxu0 0.0
        %832 = vmatpush.msra.mxu0 0.0
        %833 = vmatpush.msra.mxu0 0.0
        %834 = vmatpush.msra.mxu0 0.0
        %835 = vmatpush.msra.mxu0 0.0
        %836 = vmatpush.msra.mxu0 0.0
        %837 = vmatpush.msra.mxu0 0.0
        %838 = vmatpush.msra.mxu0 0.0
        %839 = vmatpush.msra.mxu0 0.0
        %840 = vmatpush.msra.mxu0 0.0
        %841 = vmatpush.msra.mxu0 0.0
        %842 = vmatpush.msra.mxu0 %v786
        %843 = vmatpush.msra.mxu0 %v783
        %844 = vmatmul.f32.gmra.mxu0 %v817
        %v845 = vpop.f32.mrf.mxu0
        %v846 = vadd.f32 %v812, %v845
        %847 = vmatmul.f32.gmra.mxu0 %v820
        %v848 = vpop.f32.mrf.mxu0
        %v849 = vadd.f32 %v812, %v848
        %850 = vmatmul.f32.gmra.mxu0 %v823
        %v851 = vpop.f32.mrf.mxu0
        %v852 = vadd.f32 %v812, %v851
        %853 = vmatmul.f32.gmra.mxu0 %v826
        %v854 = vpop.f32.mrf.mxu0
        %v855 = vadd.f32 %v812, %v854
        %856 = vdwg.mxu0
        %857 = vmatpush.msra.mxu0 0.0
        %858 = vmatpush.msra.mxu0 0.0
        %859 = vmatpush.msra.mxu0 0.0
        %860 = vmatpush.msra.mxu0 0.0
        %861 = vmatpush.msra.mxu0 0.0
        %862 = vmatpush.msra.mxu0 0.0
        %863 = vmatpush.msra.mxu0 0.0
        %864 = vmatpush.msra.mxu0 0.0
        %865 = vmatpush.msra.mxu0 0.0
        %866 = vmatpush.msra.mxu0 0.0
        %867 = vmatpush.msra.mxu0 0.0
        %868 = vmatpush.msra.mxu0 0.0
        %869 = vmatpush.msra.mxu0 0.0
        %870 = vmatpush.msra.mxu0 0.0
        %871 = vmatpush.msra.mxu0 %v809
        %872 = vmatpush.msra.mxu0 %v806
        %873 = vmatmul.f32.gmra.mxu0 %v817
        %v874 = vpop.f32.mrf.mxu0
        %v875 = vadd.f32 %v813, %v874
        %876 = vmatmul.f32.gmra.mxu0 %v820
        %v877 = vpop.f32.mrf.mxu0
        %v878 = vadd.f32 %v813, %v877
        %879 = vmatmul.f32.gmra.mxu0 %v823
        %v880 = vpop.f32.mrf.mxu0
        %v881 = vadd.f32 %v813, %v880
        %882 = vmatmul.f32.gmra.mxu0 %v826
        %v883 = vpop.f32.mrf.mxu0
        %v884 = vadd.f32 %v813, %v883
        %885 = vdwg.mxu0
        %v886 = vxor.u32 %v846, 2147483648
        %v887 = vxor.u32 %v849, 2147483648
        %v888 = vxor.u32 %v852, 2147483648
        %v889 = vxor.u32 %v855, 2147483648
        %v890 = vmul.f32 %v886, 1.442695
        %v891 = vpow.pop %v890
        %v892 = vmul.f32 %v887, 1.442695
        %v893 = vpow.pop %v892
        %v894 = vmul.f32 %v888, 1.442695
        %v895 = vpow.pop %v894
        %v896 = vmul.f32 %v889, 1.442695
        %v897 = vpow.pop %v896
        %v898 = vadd.f32 %v891, 1.0
        %v899 = vadd.f32 %v893, 1.0
        %v900 = vadd.f32 %v895, 1.0
        %v901 = vadd.f32 %v897, 1.0
        %v902 = vrcp.pop %v898
        %v903 = vmul.f32 %v898, %v902
        %v904 = vsub.f32 1.0, %v903
        %v905 = vmul.f32 %v902, %v904
        %v906 = vadd.f32 %v902, %v905
        %vm907 = vweird.f32 %v898
        %vm908 = vweird.f32 %v902
        %vm909 = vmor %vm907, %vm908
        %v910 = vsel %vm909, %v902, %v906
        %v911 = vand.u32 2147483647, %v898
        %vm912 = vcmp.eq.f32.partialorder %v911, 8.507059e+37
        %v913 = vand.u32 %v898, 2147483648
        %v914 = vor.u32 1.1754944e-38, %v913
        %v915 = vsel %vm912, %v914, %v910
        %v916 = vmul.f32 1.0, %v915
        %v917 = vrcp.pop %v899
        %v918 = vmul.f32 %v899, %v917
        %v919 = vsub.f32 1.0, %v918
        %v920 = vmul.f32 %v917, %v919
        %v921 = vadd.f32 %v917, %v920
        %vm922 = vweird.f32 %v899
        %vm923 = vweird.f32 %v917
        %vm924 = vmor %vm922, %vm923
        %v925 = vsel %vm924, %v917, %v921
        %v926 = vand.u32 2147483647, %v899
        %vm927 = vcmp.eq.f32.partialorder %v926, 8.507059e+37
        %v928 = vand.u32 %v899, 2147483648
        %v929 = vor.u32 1.1754944e-38, %v928
        %v930 = vsel %vm927, %v929, %v925
        %v931 = vmul.f32 1.0, %v930
        %v932 = vrcp.pop %v900
        %v933 = vmul.f32 %v900, %v932
        %v934 = vsub.f32 1.0, %v933
        %v935 = vmul.f32 %v932, %v934
        %v936 = vadd.f32 %v932, %v935
        %vm937 = vweird.f32 %v900
        %vm938 = vweird.f32 %v932
        %vm939 = vmor %vm937, %vm938
        %v940 = vsel %vm939, %v932, %v936
        %v941 = vand.u32 2147483647, %v900
        %vm942 = vcmp.eq.f32.partialorder %v941, 8.507059e+37
        %v943 = vand.u32 %v900, 2147483648
        %v944 = vor.u32 1.1754944e-38, %v943
        %v945 = vsel %vm942, %v944, %v940
        %v946 = vmul.f32 1.0, %v945
        %v947 = vrcp.pop %v901
        %v948 = vmul.f32 %v901, %v947
        %v949 = vsub.f32 1.0, %v948
        %v950 = vmul.f32 %v947, %v949
        %v951 = vadd.f32 %v947, %v950
        %vm952 = vweird.f32 %v901
        %vm953 = vweird.f32 %v947
        %vm954 = vmor %vm952, %vm953
        %v955 = vsel %vm954, %v947, %v951
        %v956 = vand.u32 2147483647, %v901
        %vm957 = vcmp.eq.f32.partialorder %v956, 8.507059e+37
        %v958 = vand.u32 %v901, 2147483648
        %v959 = vor.u32 1.1754944e-38, %v958
        %v960 = vsel %vm957, %v959, %v955
        %v961 = vmul.f32 1.0, %v960
        %v962 = vmul.f32 %v755, %v916
        %v963 = vmul.f32 %v756, %v931
        %v964 = vmul.f32 %v757, %v946
        %v965 = vmul.f32 %v758, %v961
        %v966 = vadd.f32 %v755, %v962
        %v967 = vadd.f32 %v756, %v963
        %v968 = vadd.f32 %v757, %v964
        %v969 = vadd.f32 %v758, %v965
        %v970 = vadd.f32 %v966, %v875
        %v971 = vadd.f32 %v967, %v878
        %v972 = vadd.f32 %v968, %v881
        %v973 = vadd.f32 %v969, %v884
        %974 = vmatpush.msra.mxu0 %v355
        %975 = vmatpush.msra.mxu0 %v354
        %976 = vmatpush.msra.mxu0 %v353
        %977 = vmatpush.msra.mxu0 %v352
        %978 = vmatpush.msra.mxu0 %v351
        %979 = vmatpush.msra.mxu0 %v350
        %980 = vmatpush.msra.mxu0 %v349
        %981 = vmatpush.msra.mxu0 %v348
        %982 = vmatpush.msra.mxu0 %v347
        %983 = vmatpush.msra.mxu0 %v346
        %984 = vmatpush.msra.mxu0 %v345
        %985 = vmatpush.msra.mxu0 %v344
        %986 = vmatpush.msra.mxu0 %v343
        %987 = vmatpush.msra.mxu0 %v342
        %988 = vmatpush.msra.mxu0 %v341
        %989 = vmatpush.msra.mxu0 %v340
        %990 = vmatmul.f32.gmra.mxu0 %v755
        %v991 = vpop.f32.mrf.mxu0
        %v992 = vadd.f32 0.0, %v991
        %993 = vmatmul.f32.gmra.mxu0 %v756
        %v994 = vpop.f32.mrf.mxu0
        %v995 = vadd.f32 0.0, %v994
        %996 = vmatmul.f32.gmra.mxu0 %v757
        %v997 = vpop.f32.mrf.mxu0
        %v998 = vadd.f32 0.0, %v997
        %999 = vmatmul.f32.gmra.mxu0 %v758
        %v1000 = vpop.f32.mrf.mxu0
        %v1001 = vadd.f32 0.0, %v1000
        %1002 = vdwg.mxu0
        %v1003 = vperm.slane %v372, 0
        %vm1004 = vcmask 261120
        %v1006 = vsel %vm1004, %v338, 0
        %v1009 = vsel %vm1004, %v339, 0
        %1011 = vmatpush.msra.mxu0 0.0
        %1012 = vmatpush.msra.mxu0 0.0
        %1013 = vmatpush.msra.mxu0 0.0
        %1014 = vmatpush.msra.mxu0 0.0
        %1015 = vmatpush.msra.mxu0 0.0
        %1016 = vmatpush.msra.mxu0 0.0
        %1017 = vmatpush.msra.mxu0 0.0
        %1018 = vmatpush.msra.mxu0 0.0
        %1019 = vmatpush.msra.mxu0 0.0
        %1020 = vmatpush.msra.mxu0 0.0
        %1021 = vmatpush.msra.mxu0 0.0
        %1022 = vmatpush.msra.mxu0 0.0
        %1023 = vmatpush.msra.mxu0 %v1001
        %1024 = vmatpush.msra.mxu0 %v998
        %1025 = vmatpush.msra.mxu0 %v995
        %1026 = vmatpush.msra.mxu0 %v992
        %1027 = vmatmul.f32.gmra.mxu0 %v1006
        %v1028 = vpop.f32.mrf.mxu0
        %v1029 = vadd.f32 %v1003, %v1028
        %1030 = vmatmul.f32.gmra.mxu0 %v1009
        %v1031 = vpop.f32.mrf.mxu0
        %v1032 = vadd.f32 %v1003, %v1031
        %1033 = vdwg.mxu0
        %v1034 = vxor.u32 %v1029, 2147483648
        %v1035 = vxor.u32 %v1032, 2147483648
        %v1036 = vmul.f32 %v1034, 1.442695
        %v1037 = vpow.pop %v1036
        %v1038 = vmul.f32 %v1035, 1.442695
        %v1039 = vpow.pop %v1038
        %v1040 = vadd.f32 %v1037, 1.0
        %v1041 = vadd.f32 %v1039, 1.0
        %v1042 = vrcp.pop %v1040
        %v1043 = vmul.f32 %v1040, %v1042
        %v1044 = vsub.f32 1.0, %v1043
        %v1045 = vmul.f32 %v1042, %v1044
        %v1046 = vadd.f32 %v1042, %v1045
        %vm1047 = vweird.f32 %v1040
        %vm1048 = vweird.f32 %v1042
        %vm1049 = vmor %vm1047, %vm1048
        %v1050 = vsel %vm1049, %v1042, %v1046
        %v1051 = vand.u32 2147483647, %v1040
        %vm1052 = vcmp.eq.f32.partialorder %v1051, 8.507059e+37
        %v1053 = vand.u32 %v1040, 2147483648
        %v1054 = vor.u32 1.1754944e-38, %v1053
        %v1055 = vsel %vm1052, %v1054, %v1050
        %v1056 = vmul.f32 1.0, %v1055
        %v1057 = vrcp.pop %v1041
        %v1058 = vmul.f32 %v1041, %v1057
        %v1059 = vsub.f32 1.0, %v1058
        %v1060 = vmul.f32 %v1057, %v1059
        %v1061 = vadd.f32 %v1057, %v1060
        %vm1062 = vweird.f32 %v1041
        %vm1063 = vweird.f32 %v1057
        %vm1064 = vmor %vm1062, %vm1063
        %v1065 = vsel %vm1064, %v1057, %v1061
        %v1066 = vand.u32 2147483647, %v1041
        %vm1067 = vcmp.eq.f32.partialorder %v1066, 8.507059e+37
        %v1068 = vand.u32 %v1041, 2147483648
        %v1069 = vor.u32 1.1754944e-38, %v1068
        %v1070 = vsel %vm1067, %v1069, %v1065
        %v1071 = vmul.f32 1.0, %v1070
        %v1072 = vmul.f32 %v581, %v1056
        %v1073 = vmul.f32 %v582, %v1071
        %v1074 = vadd.f32 %v581, %v1072
        %v1075 = vadd.f32 %v582, %v1073
        %v1077 = vsel %vm518, %v1074, 0
        %v1080 = vsel %vm518, %v1075, 0
        %1082 = vmatpush.msra.mxu0 0.0
        %1083 = vmatpush.msra.mxu0 0.0
        %1084 = vmatpush.msra.mxu0 0.0
        %1085 = vmatpush.msra.mxu0 0.0
        %1086 = vmatpush.msra.mxu0 0.0
        %1087 = vmatpush.msra.mxu0 0.0
        %1088 = vmatpush.msra.mxu0 0.0
        %1089 = vmatpush.msra.mxu0 0.0
        %1090 = vmatpush.msra.mxu0 0.0
        %1091 = vmatpush.msra.mxu0 0.0
        %1092 = vmatpush.msra.mxu0 0.0
        %1093 = vmatpush.msra.mxu0 0.0
        %1094 = vmatpush.msra.mxu0 0.0
        %1095 = vmatpush.msra.mxu0 0.0
        %1096 = vmatpush.msra.mxu0 0.0
        %1097 = vmatpush.msra.mxu0 %v376
        %1098 = vmatmul.f32.gmra.mxu0 %v1077
        %v1099 = vpop.f32.mrf.mxu0
        %v1100 = vadd.f32 0.0, %v1099
        %1101 = vmatmul.f32.gmra.mxu0 %v1080
        %v1102 = vpop.f32.mrf.mxu0
        %v1103 = vadd.f32 0.0, %v1102
        %1104 = vdwg.mxu0
        %1105 = vmatpush.msra.mxu0 0.0
        %1106 = vmatpush.msra.mxu0 0.0
        %1107 = vmatpush.msra.mxu0 0.0
        %1108 = vmatpush.msra.mxu0 0.0
        %1109 = vmatpush.msra.mxu0 0.0
        %1110 = vmatpush.msra.mxu0 0.0
        %1111 = vmatpush.msra.mxu0 0.0
        %1112 = vmatpush.msra.mxu0 0.0
        %1113 = vmatpush.msra.mxu0 0.0
        %1114 = vmatpush.msra.mxu0 0.0
        %1115 = vmatpush.msra.mxu0 0.0
        %1116 = vmatpush.msra.mxu0 0.0
        %1117 = vmatpush.msra.mxu0 0.0
        %1118 = vmatpush.msra.mxu0 0.0
        %1119 = vmatpush.msra.mxu0 0.0
        %1120 = vmatpush.msra.mxu0 %v377
        %1121 = vmatmul.f32.gmra.mxu0 %v1077
        %v1122 = vpop.f32.mrf.mxu0
        %v1123 = vadd.f32 0.0, %v1122
        %1124 = vmatmul.f32.gmra.mxu0 %v1080
        %v1125 = vpop.f32.mrf.mxu0
        %v1126 = vadd.f32 0.0, %v1125
        %1127 = vdwg.mxu0
        %v1129 = vperm.slane %v383, 0
        %v1130 = vperm.slane %v383, 1
        %1133 = vmatpush.msra.mxu0 0.0
        %1134 = vmatpush.msra.mxu0 0.0
        %1135 = vmatpush.msra.mxu0 0.0
        %1136 = vmatpush.msra.mxu0 0.0
        %1137 = vmatpush.msra.mxu0 0.0
        %1138 = vmatpush.msra.mxu0 0.0
        %1139 = vmatpush.msra.mxu0 0.0
        %1140 = vmatpush.msra.mxu0 0.0
        %1141 = vmatpush.msra.mxu0 0.0
        %1142 = vmatpush.msra.mxu0 0.0
        %1143 = vmatpush.msra.mxu0 0.0
        %1144 = vmatpush.msra.mxu0 0.0
        %1145 = vmatpush.msra.mxu0 0.0
        %1146 = vmatpush.msra.mxu0 0.0
        %1147 = vmatpush.msra.mxu0 %v1103
        %1148 = vmatpush.msra.mxu0 %v1100
        %1149 = vmatmul.f32.gmra.mxu0 %v817
        %v1150 = vpop.f32.mrf.mxu0
        %v1151 = vadd.f32 %v1129, %v1150
        %1152 = vmatmul.f32.gmra.mxu0 %v820
        %v1153 = vpop.f32.mrf.mxu0
        %v1154 = vadd.f32 %v1129, %v1153
        %1155 = vmatmul.f32.gmra.mxu0 %v823
        %v1156 = vpop.f32.mrf.mxu0
        %v1157 = vadd.f32 %v1129, %v1156
        %1158 = vmatmul.f32.gmra.mxu0 %v826
        %v1159 = vpop.f32.mrf.mxu0
        %v1160 = vadd.f32 %v1129, %v1159
        %1161 = vdwg.mxu0
        %1162 = vmatpush.msra.mxu0 0.0
        %1163 = vmatpush.msra.mxu0 0.0
        %1164 = vmatpush.msra.mxu0 0.0
        %1165 = vmatpush.msra.mxu0 0.0
        %1166 = vmatpush.msra.mxu0 0.0
        %1167 = vmatpush.msra.mxu0 0.0
        %1168 = vmatpush.msra.mxu0 0.0
        %1169 = vmatpush.msra.mxu0 0.0
        %1170 = vmatpush.msra.mxu0 0.0
        %1171 = vmatpush.msra.mxu0 0.0
        %1172 = vmatpush.msra.mxu0 0.0
        %1173 = vmatpush.msra.mxu0 0.0
        %1174 = vmatpush.msra.mxu0 0.0
        %1175 = vmatpush.msra.mxu0 0.0
        %1176 = vmatpush.msra.mxu0 %v1126
        %1177 = vmatpush.msra.mxu0 %v1123
        %1178 = vmatmul.f32.gmra.mxu0 %v817
        %v1179 = vpop.f32.mrf.mxu0
        %v1180 = vadd.f32 %v1130, %v1179
        %1181 = vmatmul.f32.gmra.mxu0 %v820
        %v1182 = vpop.f32.mrf.mxu0
        %v1183 = vadd.f32 %v1130, %v1182
        %1184 = vmatmul.f32.gmra.mxu0 %v823
        %v1185 = vpop.f32.mrf.mxu0
        %v1186 = vadd.f32 %v1130, %v1185
        %1187 = vmatmul.f32.gmra.mxu0 %v826
        %v1188 = vpop.f32.mrf.mxu0
        %v1189 = vadd.f32 %v1130, %v1188
        %1190 = vdwg.mxu0
        %v1191 = vxor.u32 %v1151, 2147483648
        %v1192 = vxor.u32 %v1154, 2147483648
        %v1193 = vxor.u32 %v1157, 2147483648
        %v1194 = vxor.u32 %v1160, 2147483648
        %v1195 = vmul.f32 %v1191, 1.442695
        %v1196 = vpow.pop %v1195
        %v1197 = vmul.f32 %v1192, 1.442695
        %v1198 = vpow.pop %v1197
        %v1199 = vmul.f32 %v1193, 1.442695
        %v1200 = vpow.pop %v1199
        %v1201 = vmul.f32 %v1194, 1.442695
        %v1202 = vpow.pop %v1201
        %v1203 = vadd.f32 %v1196, 1.0
        %v1204 = vadd.f32 %v1198, 1.0
        %v1205 = vadd.f32 %v1200, 1.0
        %v1206 = vadd.f32 %v1202, 1.0
        %v1207 = vrcp.pop %v1203
        %v1208 = vmul.f32 %v1203, %v1207
        %v1209 = vsub.f32 1.0, %v1208
        %v1210 = vmul.f32 %v1207, %v1209
        %v1211 = vadd.f32 %v1207, %v1210
        %vm1212 = vweird.f32 %v1203
        %vm1213 = vweird.f32 %v1207
        %vm1214 = vmor %vm1212, %vm1213
        %v1215 = vsel %vm1214, %v1207, %v1211
        %v1216 = vand.u32 2147483647, %v1203
        %vm1217 = vcmp.eq.f32.partialorder %v1216, 8.507059e+37
        %v1218 = vand.u32 %v1203, 2147483648
        %v1219 = vor.u32 1.1754944e-38, %v1218
        %v1220 = vsel %vm1217, %v1219, %v1215
        %v1221 = vmul.f32 1.0, %v1220
        %v1222 = vrcp.pop %v1204
        %v1223 = vmul.f32 %v1204, %v1222
        %v1224 = vsub.f32 1.0, %v1223
        %v1225 = vmul.f32 %v1222, %v1224
        %v1226 = vadd.f32 %v1222, %v1225
        %vm1227 = vweird.f32 %v1204
        %vm1228 = vweird.f32 %v1222
        %vm1229 = vmor %vm1227, %vm1228
        %v1230 = vsel %vm1229, %v1222, %v1226
        %v1231 = vand.u32 2147483647, %v1204
        %vm1232 = vcmp.eq.f32.partialorder %v1231, 8.507059e+37
        %v1233 = vand.u32 %v1204, 2147483648
        %v1234 = vor.u32 1.1754944e-38, %v1233
        %v1235 = vsel %vm1232, %v1234, %v1230
        %v1236 = vmul.f32 1.0, %v1235
        %v1237 = vrcp.pop %v1205
        %v1238 = vmul.f32 %v1205, %v1237
        %v1239 = vsub.f32 1.0, %v1238
        %v1240 = vmul.f32 %v1237, %v1239
        %v1241 = vadd.f32 %v1237, %v1240
        %vm1242 = vweird.f32 %v1205
        %vm1243 = vweird.f32 %v1237
        %vm1244 = vmor %vm1242, %vm1243
        %v1245 = vsel %vm1244, %v1237, %v1241
        %v1246 = vand.u32 2147483647, %v1205
        %vm1247 = vcmp.eq.f32.partialorder %v1246, 8.507059e+37
        %v1248 = vand.u32 %v1205, 2147483648
        %v1249 = vor.u32 1.1754944e-38, %v1248
        %v1250 = vsel %vm1247, %v1249, %v1245
        %v1251 = vmul.f32 1.0, %v1250
        %v1252 = vrcp.pop %v1206
        %v1253 = vmul.f32 %v1206, %v1252
        %v1254 = vsub.f32 1.0, %v1253
        %v1255 = vmul.f32 %v1252, %v1254
        %v1256 = vadd.f32 %v1252, %v1255
        %vm1257 = vweird.f32 %v1206
        %vm1258 = vweird.f32 %v1252
        %vm1259 = vmor %vm1257, %vm1258
        %v1260 = vsel %vm1259, %v1252, %v1256
        %v1261 = vand.u32 2147483647, %v1206
        %vm1262 = vcmp.eq.f32.partialorder %v1261, 8.507059e+37
        %v1263 = vand.u32 %v1206, 2147483648
        %v1264 = vor.u32 1.1754944e-38, %v1263
        %v1265 = vsel %vm1262, %v1264, %v1260
        %v1266 = vmul.f32 1.0, %v1265
        %v1267 = vmul.f32 %v970, %v1221
        %v1268 = vmul.f32 %v971, %v1236
        %v1269 = vmul.f32 %v972, %v1251
        %v1270 = vmul.f32 %v973, %v1266
        %v1271 = vadd.f32 %v970, %v1267
        %v1272 = vadd.f32 %v971, %v1268
        %v1273 = vadd.f32 %v972, %v1269
        %v1274 = vadd.f32 %v973, %v1270
        %v1275 = vadd.f32 %v1271, %v1180
        %v1276 = vadd.f32 %v1272, %v1183
        %v1277 = vadd.f32 %v1273, %v1186
        %v1278 = vadd.f32 %v1274, %v1189
        %1279 = vmatpush.msra.mxu0 %v371
        %1280 = vmatpush.msra.mxu0 %v370
        %1281 = vmatpush.msra.mxu0 %v369
        %1282 = vmatpush.msra.mxu0 %v368
        %1283 = vmatpush.msra.mxu0 %v367
        %1284 = vmatpush.msra.mxu0 %v366
        %1285 = vmatpush.msra.mxu0 %v365
        %1286 = vmatpush.msra.mxu0 %v364
        %1287 = vmatpush.msra.mxu0 %v363
        %1288 = vmatpush.msra.mxu0 %v362
        %1289 = vmatpush.msra.mxu0 %v361
        %1290 = vmatpush.msra.mxu0 %v360
        %1291 = vmatpush.msra.mxu0 %v359
        %1292 = vmatpush.msra.mxu0 %v358
        %1293 = vmatpush.msra.mxu0 %v357
        %1294 = vmatpush.msra.mxu0 %v356
        %1295 = vmatmul.f32.gmra.mxu0 %v970
        %v1296 = vpop.f32.mrf.mxu0
        %v1297 = vadd.f32 0.0, %v1296
        %1298 = vmatmul.f32.gmra.mxu0 %v971
        %v1299 = vpop.f32.mrf.mxu0
        %v1300 = vadd.f32 0.0, %v1299
        %1301 = vmatmul.f32.gmra.mxu0 %v972
        %v1302 = vpop.f32.mrf.mxu0
        %v1303 = vadd.f32 0.0, %v1302
        %1304 = vmatmul.f32.gmra.mxu0 %v973
        %v1305 = vpop.f32.mrf.mxu0
        %v1306 = vadd.f32 0.0, %v1305
        %1307 = vdwg.mxu0
        %v1308 = vperm.slane %v373, 0
        %1309 = vmatpush.msra.mxu0 0.0
        %1310 = vmatpush.msra.mxu0 0.0
        %1311 = vmatpush.msra.mxu0 0.0
        %1312 = vmatpush.msra.mxu0 0.0
        %1313 = vmatpush.msra.mxu0 0.0
        %1314 = vmatpush.msra.mxu0 0.0
        %1315 = vmatpush.msra.mxu0 0.0
        %1316 = vmatpush.msra.mxu0 0.0
        %1317 = vmatpush.msra.mxu0 0.0
        %1318 = vmatpush.msra.mxu0 0.0
        %1319 = vmatpush.msra.mxu0 0.0
        %1320 = vmatpush.msra.mxu0 0.0
        %1321 = vmatpush.msra.mxu0 %v1306
        %1322 = vmatpush.msra.mxu0 %v1303
        %1323 = vmatpush.msra.mxu0 %v1300
        %1324 = vmatpush.msra.mxu0 %v1297
        %1325 = vmatmul.f32.gmra.mxu0 %v1006
        %v1326 = vpop.f32.mrf.mxu0
        %v1327 = vadd.f32 %v1308, %v1326
        %1328 = vmatmul.f32.gmra.mxu0 %v1009
        %v1329 = vpop.f32.mrf.mxu0
        %v1330 = vadd.f32 %v1308, %v1329
        %1331 = vdwg.mxu0
        %v1332 = vxor.u32 %v1327, 2147483648
        %v1333 = vxor.u32 %v1330, 2147483648
        %v1334 = vmul.f32 %v1332, 1.442695
        %v1335 = vpow.pop %v1334
        %v1336 = vmul.f32 %v1333, 1.442695
        %v1337 = vpow.pop %v1336
        %v1338 = vadd.f32 %v1335, 1.0
        %v1339 = vadd.f32 %v1337, 1.0
        %v1340 = vrcp.pop %v1338
        %v1341 = vmul.f32 %v1338, %v1340
        %v1342 = vsub.f32 1.0, %v1341
        %v1343 = vmul.f32 %v1340, %v1342
        %v1344 = vadd.f32 %v1340, %v1343
        %vm1345 = vweird.f32 %v1338
        %vm1346 = vweird.f32 %v1340
        %vm1347 = vmor %vm1345, %vm1346
        %v1348 = vsel %vm1347, %v1340, %v1344
        %v1349 = vand.u32 2147483647, %v1338
        %vm1350 = vcmp.eq.f32.partialorder %v1349, 8.507059e+37
        %v1351 = vand.u32 %v1338, 2147483648
        %v1352 = vor.u32 1.1754944e-38, %v1351
        %v1353 = vsel %vm1350, %v1352, %v1348
        %v1354 = vmul.f32 1.0, %v1353
        %v1355 = vrcp.pop %v1339
        %v1356 = vmul.f32 %v1339, %v1355
        %v1357 = vsub.f32 1.0, %v1356
        %v1358 = vmul.f32 %v1355, %v1357
        %v1359 = vadd.f32 %v1355, %v1358
        %vm1360 = vweird.f32 %v1339
        %vm1361 = vweird.f32 %v1355
        %vm1362 = vmor %vm1360, %vm1361
        %v1363 = vsel %vm1362, %v1355, %v1359
        %v1364 = vand.u32 2147483647, %v1339
        %vm1365 = vcmp.eq.f32.partialorder %v1364, 8.507059e+37
        %v1366 = vand.u32 %v1339, 2147483648
        %v1367 = vor.u32 1.1754944e-38, %v1366
        %v1368 = vsel %vm1365, %v1367, %v1363
        %v1369 = vmul.f32 1.0, %v1368
        %v1370 = vmul.f32 %v1074, %v1354
        %v1371 = vmul.f32 %v1075, %v1369
        %v1372 = vadd.f32 %v1074, %v1370
        %v1373 = vadd.f32 %v1075, %v1371
        %v1375 = vsel %vm518, %v1372, 0
        %v1378 = vsel %vm518, %v1373, 0
        %1380 = vmatpush.msra.mxu0 0.0
        %1381 = vmatpush.msra.mxu0 0.0
        %1382 = vmatpush.msra.mxu0 0.0
        %1383 = vmatpush.msra.mxu0 0.0
        %1384 = vmatpush.msra.mxu0 0.0
        %1385 = vmatpush.msra.mxu0 0.0
        %1386 = vmatpush.msra.mxu0 0.0
        %1387 = vmatpush.msra.mxu0 0.0
        %1388 = vmatpush.msra.mxu0 0.0
        %1389 = vmatpush.msra.mxu0 0.0
        %1390 = vmatpush.msra.mxu0 0.0
        %1391 = vmatpush.msra.mxu0 0.0
        %1392 = vmatpush.msra.mxu0 0.0
        %1393 = vmatpush.msra.mxu0 0.0
        %1394 = vmatpush.msra.mxu0 0.0
        %1395 = vmatpush.msra.mxu0 %v378
        %1396 = vmatmul.f32.gmra.mxu0 %v1375
        %v1397 = vpop.f32.mrf.mxu0
        %v1398 = vadd.f32 0.0, %v1397
        %1399 = vmatmul.f32.gmra.mxu0 %v1378
        %v1400 = vpop.f32.mrf.mxu0
        %v1401 = vadd.f32 0.0, %v1400
        %1402 = vdwg.mxu0
        %1403 = vmatpush.msra.mxu0 0.0
        %1404 = vmatpush.msra.mxu0 0.0
        %1405 = vmatpush.msra.mxu0 0.0
        %1406 = vmatpush.msra.mxu0 0.0
        %1407 = vmatpush.msra.mxu0 0.0
        %1408 = vmatpush.msra.mxu0 0.0
        %1409 = vmatpush.msra.mxu0 0.0
        %1410 = vmatpush.msra.mxu0 0.0
        %1411 = vmatpush.msra.mxu0 0.0
        %1412 = vmatpush.msra.mxu0 0.0
        %1413 = vmatpush.msra.mxu0 0.0
        %1414 = vmatpush.msra.mxu0 0.0
        %1415 = vmatpush.msra.mxu0 0.0
        %1416 = vmatpush.msra.mxu0 0.0
        %1417 = vmatpush.msra.mxu0 0.0
        %1418 = vmatpush.msra.mxu0 %v379
        %1419 = vmatmul.f32.gmra.mxu0 %v1375
        %v1420 = vpop.f32.mrf.mxu0
        %v1421 = vadd.f32 0.0, %v1420
        %1422 = vmatmul.f32.gmra.mxu0 %v1378
        %v1423 = vpop.f32.mrf.mxu0
        %v1424 = vadd.f32 0.0, %v1423
        %1425 = vdwg.mxu0
        %v1427 = vperm.slane %v385, 0
        %v1428 = vperm.slane %v385, 1
        %1431 = vmatpush.msra.mxu0 0.0
        %1432 = vmatpush.msra.mxu0 0.0
        %1433 = vmatpush.msra.mxu0 0.0
        %1434 = vmatpush.msra.mxu0 0.0
        %1435 = vmatpush.msra.mxu0 0.0
        %1436 = vmatpush.msra.mxu0 0.0
        %1437 = vmatpush.msra.mxu0 0.0
        %1438 = vmatpush.msra.mxu0 0.0
        %1439 = vmatpush.msra.mxu0 0.0
        %1440 = vmatpush.msra.mxu0 0.0
        %1441 = vmatpush.msra.mxu0 0.0
        %1442 = vmatpush.msra.mxu0 0.0
        %1443 = vmatpush.msra.mxu0 0.0
        %1444 = vmatpush.msra.mxu0 0.0
        %1445 = vmatpush.msra.mxu0 %v1401
        %1446 = vmatpush.msra.mxu0 %v1398
        %1447 = vmatmul.f32.gmra.mxu0 %v817
        %v1448 = vpop.f32.mrf.mxu0
        %v1449 = vadd.f32 %v1427, %v1448
        %1450 = vmatmul.f32.gmra.mxu0 %v820
        %v1451 = vpop.f32.mrf.mxu0
        %v1452 = vadd.f32 %v1427, %v1451
        %1453 = vmatmul.f32.gmra.mxu0 %v823
        %v1454 = vpop.f32.mrf.mxu0
        %v1455 = vadd.f32 %v1427, %v1454
        %1456 = vmatmul.f32.gmra.mxu0 %v826
        %v1457 = vpop.f32.mrf.mxu0
        %v1458 = vadd.f32 %v1427, %v1457
        %1459 = vdwg.mxu0
        %1460 = vmatpush.msra.mxu0 0.0
        %1461 = vmatpush.msra.mxu0 0.0
        %1462 = vmatpush.msra.mxu0 0.0
        %1463 = vmatpush.msra.mxu0 0.0
        %1464 = vmatpush.msra.mxu0 0.0
        %1465 = vmatpush.msra.mxu0 0.0
        %1466 = vmatpush.msra.mxu0 0.0
        %1467 = vmatpush.msra.mxu0 0.0
        %1468 = vmatpush.msra.mxu0 0.0
        %1469 = vmatpush.msra.mxu0 0.0
        %1470 = vmatpush.msra.mxu0 0.0
        %1471 = vmatpush.msra.mxu0 0.0
        %1472 = vmatpush.msra.mxu0 0.0
        %1473 = vmatpush.msra.mxu0 0.0
        %1474 = vmatpush.msra.mxu0 %v1424
        %1475 = vmatpush.msra.mxu0 %v1421
        %1476 = vmatmul.f32.gmra.mxu0 %v817
        %v1477 = vpop.f32.mrf.mxu0
        %v1478 = vadd.f32 %v1428, %v1477
        %1479 = vmatmul.f32.gmra.mxu0 %v820
        %v1480 = vpop.f32.mrf.mxu0
        %v1481 = vadd.f32 %v1428, %v1480
        %1482 = vmatmul.f32.gmra.mxu0 %v823
        %v1483 = vpop.f32.mrf.mxu0
        %v1484 = vadd.f32 %v1428, %v1483
        %1485 = vmatmul.f32.gmra.mxu0 %v826
        %v1486 = vpop.f32.mrf.mxu0
        %v1487 = vadd.f32 %v1428, %v1486
        %1488 = vdwg.mxu0
        %v1489 = vxor.u32 %v1449, 2147483648
        %v1490 = vxor.u32 %v1452, 2147483648
        %v1491 = vxor.u32 %v1455, 2147483648
        %v1492 = vxor.u32 %v1458, 2147483648
        %v1493 = vmul.f32 %v1489, 1.442695
        %v1494 = vpow.pop %v1493
        %v1495 = vmul.f32 %v1490, 1.442695
        %v1496 = vpow.pop %v1495
        %v1497 = vmul.f32 %v1491, 1.442695
        %v1498 = vpow.pop %v1497
        %v1499 = vmul.f32 %v1492, 1.442695
        %v1500 = vpow.pop %v1499
        %v1501 = vadd.f32 %v1494, 1.0
        %v1502 = vadd.f32 %v1496, 1.0
        %v1503 = vadd.f32 %v1498, 1.0
        %v1504 = vadd.f32 %v1500, 1.0
        %v1505 = vrcp.pop %v1501
        %v1506 = vmul.f32 %v1501, %v1505
        %v1507 = vsub.f32 1.0, %v1506
        %v1508 = vmul.f32 %v1505, %v1507
        %v1509 = vadd.f32 %v1505, %v1508
        %vm1510 = vweird.f32 %v1501
        %vm1511 = vweird.f32 %v1505
        %vm1512 = vmor %vm1510, %vm1511
        %v1513 = vsel %vm1512, %v1505, %v1509
        %v1514 = vand.u32 2147483647, %v1501
        %vm1515 = vcmp.eq.f32.partialorder %v1514, 8.507059e+37
        %v1516 = vand.u32 %v1501, 2147483648
        %v1517 = vor.u32 1.1754944e-38, %v1516
        %v1518 = vsel %vm1515, %v1517, %v1513
        %v1519 = vmul.f32 1.0, %v1518
        %v1520 = vrcp.pop %v1502
        %v1521 = vmul.f32 %v1502, %v1520
        %v1522 = vsub.f32 1.0, %v1521
        %v1523 = vmul.f32 %v1520, %v1522
        %v1524 = vadd.f32 %v1520, %v1523
        %vm1525 = vweird.f32 %v1502
        %vm1526 = vweird.f32 %v1520
        %vm1527 = vmor %vm1525, %vm1526
        %v1528 = vsel %vm1527, %v1520, %v1524
        %v1529 = vand.u32 2147483647, %v1502
        %vm1530 = vcmp.eq.f32.partialorder %v1529, 8.507059e+37
        %v1531 = vand.u32 %v1502, 2147483648
        %v1532 = vor.u32 1.1754944e-38, %v1531
        %v1533 = vsel %vm1530, %v1532, %v1528
        %v1534 = vmul.f32 1.0, %v1533
        %v1535 = vrcp.pop %v1503
        %v1536 = vmul.f32 %v1503, %v1535
        %v1537 = vsub.f32 1.0, %v1536
        %v1538 = vmul.f32 %v1535, %v1537
        %v1539 = vadd.f32 %v1535, %v1538
        %vm1540 = vweird.f32 %v1503
        %vm1541 = vweird.f32 %v1535
        %vm1542 = vmor %vm1540, %vm1541
        %v1543 = vsel %vm1542, %v1535, %v1539
        %v1544 = vand.u32 2147483647, %v1503
        %vm1545 = vcmp.eq.f32.partialorder %v1544, 8.507059e+37
        %v1546 = vand.u32 %v1503, 2147483648
        %v1547 = vor.u32 1.1754944e-38, %v1546
        %v1548 = vsel %vm1545, %v1547, %v1543
        %v1549 = vmul.f32 1.0, %v1548
        %v1550 = vrcp.pop %v1504
        %v1551 = vmul.f32 %v1504, %v1550
        %v1552 = vsub.f32 1.0, %v1551
        %v1553 = vmul.f32 %v1550, %v1552
        %v1554 = vadd.f32 %v1550, %v1553
        %vm1555 = vweird.f32 %v1504
        %vm1556 = vweird.f32 %v1550
        %vm1557 = vmor %vm1555, %vm1556
        %v1558 = vsel %vm1557, %v1550, %v1554
        %v1559 = vand.u32 2147483647, %v1504
        %vm1560 = vcmp.eq.f32.partialorder %v1559, 8.507059e+37
        %v1561 = vand.u32 %v1504, 2147483648
        %v1562 = vor.u32 1.1754944e-38, %v1561
        %v1563 = vsel %vm1560, %v1562, %v1558
        %v1564 = vmul.f32 1.0, %v1563
        %v1565 = vmul.f32 %v1275, %v1519
        %v1566 = vmul.f32 %v1276, %v1534
        %v1567 = vmul.f32 %v1277, %v1549
        %v1568 = vmul.f32 %v1278, %v1564
        %v1569 = vadd.f32 %v1275, %v1565
        %v1570 = vadd.f32 %v1276, %v1566
        %v1571 = vadd.f32 %v1277, %v1567
        %v1572 = vadd.f32 %v1278, %v1568
        %v1573 = vadd.f32 %v1569, %v1478
        %v1574 = vadd.f32 %v1570, %v1481
        %v1575 = vadd.f32 %v1571, %v1484
        %v1576 = vadd.f32 %v1572, %v1487
        %v1577 = vadd.f32 %v608, %v1573
        %v1578 = vadd.f32 %v611, %v1574
        %v1579 = vadd.f32 %v608, %v1575
        %v1580 = vadd.f32 %v611, %v1576
        %1581 = vmatpush.msra.mxu0 %v476
        %1582 = vmatpush.msra.mxu0 %v474
        %1583 = vmatpush.msra.mxu0 %v472
        %1584 = vmatpush.msra.mxu0 %v470
        %1585 = vmatpush.msra.mxu0 %v468
        %1586 = vmatpush.msra.mxu0 %v466
        %1587 = vmatpush.msra.mxu0 %v464
        %1588 = vmatpush.msra.mxu0 %v462
        %1589 = vmatpush.msra.mxu0 %v460
        %1590 = vmatpush.msra.mxu0 %v458
        %1591 = vmatpush.msra.mxu0 %v456
        %1592 = vmatpush.msra.mxu0 %v454
        %1593 = vmatpush.msra.mxu0 %v452
        %1594 = vmatpush.msra.mxu0 %v450
        %1595 = vmatpush.msra.mxu0 %v448
        %1596 = vmatpush.msra.mxu0 %v446
        %1597 = vmatmul.f32.gmra.mxu0 %v1577
        %v1598 = vpop.f32.mrf.mxu0
        %v1599 = vadd.f32 %v614, %v1598
        %1600 = vmatmul.f32.gmra.mxu0 %v1578
        %v1601 = vpop.f32.mrf.mxu0
        %v1602 = vadd.f32 %v614, %v1601
        %1603 = vmatmul.f32.gmra.mxu0 %v1579
        %v1604 = vpop.f32.mrf.mxu0
        %v1605 = vadd.f32 %v614, %v1604
        %1606 = vmatmul.f32.gmra.mxu0 %v1580
        %v1607 = vpop.f32.mrf.mxu0
        %v1608 = vadd.f32 %v614, %v1607
        %1609 = vdwg.mxu0
        %1610 = vmatpush.msra.mxu0 %v477
        %1611 = vmatpush.msra.mxu0 %v475
        %1612 = vmatpush.msra.mxu0 %v473
        %1613 = vmatpush.msra.mxu0 %v471
        %1614 = vmatpush.msra.mxu0 %v469
        %1615 = vmatpush.msra.mxu0 %v467
        %1616 = vmatpush.msra.mxu0 %v465
        %1617 = vmatpush.msra.mxu0 %v463
        %1618 = vmatpush.msra.mxu0 %v461
        %1619 = vmatpush.msra.mxu0 %v459
        %1620 = vmatpush.msra.mxu0 %v457
        %1621 = vmatpush.msra.mxu0 %v455
        %1622 = vmatpush.msra.mxu0 %v453
        %1623 = vmatpush.msra.mxu0 %v451
        %1624 = vmatpush.msra.mxu0 %v449
        %1625 = vmatpush.msra.mxu0 %v447
        %1626 = vmatmul.f32.gmra.mxu0 %v1577
        %v1627 = vpop.f32.mrf.mxu0
        %v1628 = vadd.f32 %v615, %v1627
        %1629 = vmatmul.f32.gmra.mxu0 %v1578
        %v1630 = vpop.f32.mrf.mxu0
        %v1631 = vadd.f32 %v615, %v1630
        %1632 = vmatmul.f32.gmra.mxu0 %v1579
        %v1633 = vpop.f32.mrf.mxu0
        %v1634 = vadd.f32 %v615, %v1633
        %1635 = vmatmul.f32.gmra.mxu0 %v1580
        %v1636 = vpop.f32.mrf.mxu0
        %v1637 = vadd.f32 %v615, %v1636
        %1638 = vdwg.mxu0
        %v1639 = vmax.f32 %v1599, 0.0
        %v1640 = vmax.f32 %v1628, 0.0
        %v1641 = vmax.f32 %v1602, 0.0
        %v1642 = vmax.f32 %v1631, 0.0
        %v1643 = vmax.f32 %v1605, 0.0
        %v1644 = vmax.f32 %v1634, 0.0
        %v1645 = vmax.f32 %v1608, 0.0
        %v1646 = vmax.f32 %v1637, 0.0
        %v1648 = vsel %vm551, %v1640, 0
        %v1651 = vsel %vm551, %v1642, 0
        %v1654 = vsel %vm551, %v1644, 0
        %v1657 = vsel %vm551, %v1646, 0
        %1659 = vmatpush.msra.mxu0 %v404
        %1660 = vmatpush.msra.mxu0 %v403
        %1661 = vmatpush.msra.mxu0 %v402
        %1662 = vmatpush.msra.mxu0 %v401
        %1663 = vmatpush.msra.mxu0 %v400
        %1664 = vmatpush.msra.mxu0 %v399
        %1665 = vmatpush.msra.mxu0 %v398
        %1666 = vmatpush.msra.mxu0 %v397
        %1667 = vmatpush.msra.mxu0 %v396
        %1668 = vmatpush.msra.mxu0 %v395
        %1669 = vmatpush.msra.mxu0 %v394
        %1670 = vmatpush.msra.mxu0 %v393
        %1671 = vmatpush.msra.mxu0 %v392
        %1672 = vmatpush.msra.mxu0 %v391
        %1673 = vmatpush.msra.mxu0 %v390
        %1674 = vmatpush.msra.mxu0 %v389
        %1675 = vmatmul.f32.gmra.mxu0 %v1639
        %v1676 = vpop.f32.mrf.mxu0
        %v1677 = vadd.f32 %v684, %v1676
        %1678 = vmatmul.f32.gmra.mxu0 %v1641
        %v1679 = vpop.f32.mrf.mxu0
        %v1680 = vadd.f32 %v684, %v1679
        %1681 = vmatmul.f32.gmra.mxu0 %v1643
        %v1682 = vpop.f32.mrf.mxu0
        %v1683 = vadd.f32 %v684, %v1682
        %1684 = vmatmul.f32.gmra.mxu0 %v1645
        %v1685 = vpop.f32.mrf.mxu0
        %v1686 = vadd.f32 %v684, %v1685
        %1687 = vdwg.mxu0
        %1688 = vmatpush.msra.mxu0 0.0
        %1689 = vmatpush.msra.mxu0 0.0
        %1690 = vmatpush.msra.mxu0 0.0
        %1691 = vmatpush.msra.mxu0 0.0
        %1692 = vmatpush.msra.mxu0 0.0
        %1693 = vmatpush.msra.mxu0 0.0
        %1694 = vmatpush.msra.mxu0 0.0
        %1695 = vmatpush.msra.mxu0 0.0
        %1696 = vmatpush.msra.mxu0 0.0
        %1697 = vmatpush.msra.mxu0 0.0
        %1698 = vmatpush.msra.mxu0 0.0
        %1699 = vmatpush.msra.mxu0 0.0
        %1700 = vmatpush.msra.mxu0 0.0
        %1701 = vmatpush.msra.mxu0 0.0
        %1702 = vmatpush.msra.mxu0 %v406
        %1703 = vmatpush.msra.mxu0 %v405
        %1704 = vmatmul.f32.gmra.mxu0 %v1648
        %v1705 = vpop.f32.mrf.mxu0
        %v1706 = vadd.f32 %v1677, %v1705
        %1707 = vmatmul.f32.gmra.mxu0 %v1651
        %v1708 = vpop.f32.mrf.mxu0
        %v1709 = vadd.f32 %v1680, %v1708
        %1710 = vmatmul.f32.gmra.mxu0 %v1654
        %v1711 = vpop.f32.mrf.mxu0
        %v1712 = vadd.f32 %v1683, %v1711
        %1713 = vmatmul.f32.gmra.mxu0 %v1657
        %v1714 = vpop.f32.mrf.mxu0
        %v1715 = vadd.f32 %v1686, %v1714
        %1716 = vdwg.mxu0
        %v1717 = vadd.f32 %v1577, %v1706
        %v1718 = vadd.f32 %v1578, %v1709
        %v1719 = vadd.f32 %v1579, %v1712
        %v1720 = vadd.f32 %v1580, %v1715
        %v1721 = vadd.f32 %v608, %v1717
        %v1722 = vadd.f32 %v611, %v1718
        %v1723 = vadd.f32 %v608, %v1719
        %v1724 = vadd.f32 %v611, %v1720
        %1725 = vmatpush.msra.mxu0 %v476
        %1726 = vmatpush.msra.mxu0 %v474
        %1727 = vmatpush.msra.mxu0 %v472
        %1728 = vmatpush.msra.mxu0 %v470
        %1729 = vmatpush.msra.mxu0 %v468
        %1730 = vmatpush.msra.mxu0 %v466
        %1731 = vmatpush.msra.mxu0 %v464
        %1732 = vmatpush.msra.mxu0 %v462
        %1733 = vmatpush.msra.mxu0 %v460
        %1734 = vmatpush.msra.mxu0 %v458
        %1735 = vmatpush.msra.mxu0 %v456
        %1736 = vmatpush.msra.mxu0 %v454
        %1737 = vmatpush.msra.mxu0 %v452
        %1738 = vmatpush.msra.mxu0 %v450
        %1739 = vmatpush.msra.mxu0 %v448
        %1740 = vmatpush.msra.mxu0 %v446
        %1741 = vmatmul.f32.gmra.mxu0 %v1721
        %v1742 = vpop.f32.mrf.mxu0
        %v1743 = vadd.f32 %v614, %v1742
        %1744 = vmatmul.f32.gmra.mxu0 %v1722
        %v1745 = vpop.f32.mrf.mxu0
        %v1746 = vadd.f32 %v614, %v1745
        %1747 = vmatmul.f32.gmra.mxu0 %v1723
        %v1748 = vpop.f32.mrf.mxu0
        %v1749 = vadd.f32 %v614, %v1748
        %1750 = vmatmul.f32.gmra.mxu0 %v1724
        %v1751 = vpop.f32.mrf.mxu0
        %v1752 = vadd.f32 %v614, %v1751
        %1753 = vdwg.mxu0
        %1754 = vmatpush.msra.mxu0 %v477
        %1755 = vmatpush.msra.mxu0 %v475
        %1756 = vmatpush.msra.mxu0 %v473
        %1757 = vmatpush.msra.mxu0 %v471
        %1758 = vmatpush.msra.mxu0 %v469
        %1759 = vmatpush.msra.mxu0 %v467
        %1760 = vmatpush.msra.mxu0 %v465
        %1761 = vmatpush.msra.mxu0 %v463
        %1762 = vmatpush.msra.mxu0 %v461
        %1763 = vmatpush.msra.mxu0 %v459
        %1764 = vmatpush.msra.mxu0 %v457
        %1765 = vmatpush.msra.mxu0 %v455
        %1766 = vmatpush.msra.mxu0 %v453
        %1767 = vmatpush.msra.mxu0 %v451
        %1768 = vmatpush.msra.mxu0 %v449
        %1769 = vmatpush.msra.mxu0 %v447
        %1770 = vmatmul.f32.gmra.mxu0 %v1721
        %v1771 = vpop.f32.mrf.mxu0
        %v1772 = vadd.f32 %v615, %v1771
        %1773 = vmatmul.f32.gmra.mxu0 %v1722
        %v1774 = vpop.f32.mrf.mxu0
        %v1775 = vadd.f32 %v615, %v1774
        %1776 = vmatmul.f32.gmra.mxu0 %v1723
        %v1777 = vpop.f32.mrf.mxu0
        %v1778 = vadd.f32 %v615, %v1777
        %1779 = vmatmul.f32.gmra.mxu0 %v1724
        %v1780 = vpop.f32.mrf.mxu0
        %v1781 = vadd.f32 %v615, %v1780
        %1782 = vdwg.mxu0
        %v1783 = vmax.f32 %v1743, 0.0
        %v1784 = vmax.f32 %v1772, 0.0
        %v1785 = vmax.f32 %v1746, 0.0
        %v1786 = vmax.f32 %v1775, 0.0
        %v1787 = vmax.f32 %v1749, 0.0
        %v1788 = vmax.f32 %v1778, 0.0
        %v1789 = vmax.f32 %v1752, 0.0
        %v1790 = vmax.f32 %v1781, 0.0
        %v1792 = vsel %vm551, %v1784, 0
        %v1795 = vsel %vm551, %v1786, 0
        %v1798 = vsel %vm551, %v1788, 0
        %v1801 = vsel %vm551, %v1790, 0
        %1803 = vmatpush.msra.mxu0 %v404
        %1804 = vmatpush.msra.mxu0 %v403
        %1805 = vmatpush.msra.mxu0 %v402
        %1806 = vmatpush.msra.mxu0 %v401
        %1807 = vmatpush.msra.mxu0 %v400
        %1808 = vmatpush.msra.mxu0 %v399
        %1809 = vmatpush.msra.mxu0 %v398
        %1810 = vmatpush.msra.mxu0 %v397
        %1811 = vmatpush.msra.mxu0 %v396
        %1812 = vmatpush.msra.mxu0 %v395
        %1813 = vmatpush.msra.mxu0 %v394
        %1814 = vmatpush.msra.mxu0 %v393
        %1815 = vmatpush.msra.mxu0 %v392
        %1816 = vmatpush.msra.mxu0 %v391
        %1817 = vmatpush.msra.mxu0 %v390
        %1818 = vmatpush.msra.mxu0 %v389
        %1819 = vmatmul.f32.gmra.mxu0 %v1783
        %v1820 = vpop.f32.mrf.mxu0
        %v1821 = vadd.f32 %v684, %v1820
        %1822 = vmatmul.f32.gmra.mxu0 %v1785
        %v1823 = vpop.f32.mrf.mxu0
        %v1824 = vadd.f32 %v684, %v1823
        %1825 = vmatmul.f32.gmra.mxu0 %v1787
        %v1826 = vpop.f32.mrf.mxu0
        %v1827 = vadd.f32 %v684, %v1826
        %1828 = vmatmul.f32.gmra.mxu0 %v1789
        %v1829 = vpop.f32.mrf.mxu0
        %v1830 = vadd.f32 %v684, %v1829
        %1831 = vdwg.mxu0
        %1832 = vmatpush.msra.mxu0 0.0
        %1833 = vmatpush.msra.mxu0 0.0
        %1834 = vmatpush.msra.mxu0 0.0
        %1835 = vmatpush.msra.mxu0 0.0
        %1836 = vmatpush.msra.mxu0 0.0
        %1837 = vmatpush.msra.mxu0 0.0
        %1838 = vmatpush.msra.mxu0 0.0
        %1839 = vmatpush.msra.mxu0 0.0
        %1840 = vmatpush.msra.mxu0 0.0
        %1841 = vmatpush.msra.mxu0 0.0
        %1842 = vmatpush.msra.mxu0 0.0
        %1843 = vmatpush.msra.mxu0 0.0
        %1844 = vmatpush.msra.mxu0 0.0
        %1845 = vmatpush.msra.mxu0 0.0
        %1846 = vmatpush.msra.mxu0 %v406
        %1847 = vmatpush.msra.mxu0 %v405
        %1848 = vmatmul.f32.gmra.mxu0 %v1792
        %v1849 = vpop.f32.mrf.mxu0
        %v1850 = vadd.f32 %v1821, %v1849
        %1851 = vmatmul.f32.gmra.mxu0 %v1795
        %v1852 = vpop.f32.mrf.mxu0
        %v1853 = vadd.f32 %v1824, %v1852
        %1854 = vmatmul.f32.gmra.mxu0 %v1798
        %v1855 = vpop.f32.mrf.mxu0
        %v1856 = vadd.f32 %v1827, %v1855
        %1857 = vmatmul.f32.gmra.mxu0 %v1801
        %v1858 = vpop.f32.mrf.mxu0
        %v1859 = vadd.f32 %v1830, %v1858
        %1860 = vdwg.mxu0
        %v1861 = vadd.f32 %v1721, %v1850
        %v1862 = vadd.f32 %v1722, %v1853
        %v1863 = vadd.f32 %v1723, %v1856
        %v1864 = vadd.f32 %v1724, %v1859
        %v1865 = vperm.slane %v424, 0
        %1866 = vmatpush.msra.mxu0 %v423
        %1867 = vmatpush.msra.mxu0 %v422
        %1868 = vmatpush.msra.mxu0 %v421
        %1869 = vmatpush.msra.mxu0 %v420
        %1870 = vmatpush.msra.mxu0 %v419
        %1871 = vmatpush.msra.mxu0 %v418
        %1872 = vmatpush.msra.mxu0 %v417
        %1873 = vmatpush.msra.mxu0 %v416
        %1874 = vmatpush.msra.mxu0 %v415
        %1875 = vmatpush.msra.mxu0 %v414
        %1876 = vmatpush.msra.mxu0 %v413
        %1877 = vmatpush.msra.mxu0 %v412
        %1878 = vmatpush.msra.mxu0 %v411
        %1879 = vmatpush.msra.mxu0 %v410
        %1880 = vmatpush.msra.mxu0 %v409
        %1881 = vmatpush.msra.mxu0 %v408
        %1882 = vmatmul.f32.gmra.mxu0 %v1861
        %v1883 = vpop.f32.mrf.mxu0
        %v1884 = vadd.f32 %v1865, %v1883
        %1885 = vmatmul.f32.gmra.mxu0 %v1862
        %v1886 = vpop.f32.mrf.mxu0
        %v1887 = vadd.f32 %v1865, %v1886
        %1888 = vmatmul.f32.gmra.mxu0 %v1863
        %v1889 = vpop.f32.mrf.mxu0
        %v1890 = vadd.f32 %v1865, %v1889
        %1891 = vmatmul.f32.gmra.mxu0 %v1864
        %v1892 = vpop.f32.mrf.mxu0
        %v1893 = vadd.f32 %v1865, %v1892
        %1894 = vdwg.mxu0
        %v1895 = vmax.f32 %v1884, 0.0
        %v1896 = vmax.f32 %v1887, 0.0
        %v1897 = vmax.f32 %v1890, 0.0
        %v1898 = vmax.f32 %v1893, 0.0
        %v1899 = vmul.f32 %v1895, %v608
        %v1900 = vmul.f32 %v1896, %v611
        %v1901 = vmul.f32 %v1897, %v608
        %v1902 = vmul.f32 %v1898, %v611
        %v1903 = vperm.slane %v441, 0
        %1904 = vmatpush.msra.mxu0 %v440
        %1905 = vmatpush.msra.mxu0 %v439
        %1906 = vmatpush.msra.mxu0 %v438
        %1907 = vmatpush.msra.mxu0 %v437
        %1908 = vmatpush.msra.mxu0 %v436
        %1909 = vmatpush.msra.mxu0 %v435
        %1910 = vmatpush.msra.mxu0 %v434
        %1911 = vmatpush.msra.mxu0 %v433
        %1912 = vmatpush.msra.mxu0 %v432
        %1913 = vmatpush.msra.mxu0 %v431
        %1914 = vmatpush.msra.mxu0 %v430
        %1915 = vmatpush.msra.mxu0 %v429
        %1916 = vmatpush.msra.mxu0 %v428
        %1917 = vmatpush.msra.mxu0 %v427
        %1918 = vmatpush.msra.mxu0 %v426
        %1919 = vmatpush.msra.mxu0 %v425
        %1920 = vmatmul.f32.gmra.mxu0 %v1899
        %v1921 = vpop.f32.mrf.mxu0
        %v1922 = vadd.f32 %v1903, %v1921
        %1923 = vmatmul.f32.gmra.mxu0 %v1900
        %v1924 = vpop.f32.mrf.mxu0
        %v1925 = vadd.f32 %v1903, %v1924
        %1926 = vmatmul.f32.gmra.mxu0 %v1901
        %v1927 = vpop.f32.mrf.mxu0
        %v1928 = vadd.f32 %v1903, %v1927
        %1929 = vmatmul.f32.gmra.mxu0 %v1902
        %v1930 = vpop.f32.mrf.mxu0
        %v1931 = vadd.f32 %v1903, %v1930
        %1932 = vdwg.mxu0
        %v1933 = vmul.f32 %v1922, %v442
        %v1934 = vmul.f32 %v1925, %v443
        %v1935 = vmul.f32 %v1928, %v444
        %v1936 = vmul.f32 %v1931, %v445
        %v1937 = vlaneseq
        %v1938 = vshrl.u32 %v1937, 7
        %v1939 = vadd.s32 %v1938, 8
        %v1940 = vadd.s32 %v1938, 16
        %v1941 = vadd.s32 %v1938, 24
        %v1942 = vand.u32 %v1938, 15
        %v1943 = vand.u32 %v1939, 15
        %v1944 = vand.u32 %v1940, 15
        %v1945 = vand.u32 %v1941, 15
        %v1946 = vand.u32 %v1942, 1
        %v1947 = vand.u32 %v1943, 1
        %v1948 = vand.u32 %v1944, 1
        %v1949 = vand.u32 %v1945, 1
        %v1950 = vcvt.s32.f32 %v1946
        %v1951 = vcvt.s32.f32 %v1947
        %v1952 = vcvt.s32.f32 %v1948
        %v1953 = vcvt.s32.f32 %v1949
        %1954 = vrot.lane.b32.xlu0 %v1933, 8
        %v1955 = vpop.permute.xlu0 %1954
        %1956 = vrot.lane.b32.xlu0 %v1934, 8
        %v1957 = vpop.permute.xlu0 %1956
        %1958 = vrot.lane.b32.xlu0 %v1935, 8
        %v1959 = vpop.permute.xlu0 %1958
        %1960 = vrot.lane.b32.xlu0 %v1936, 8
        %v1961 = vpop.permute.xlu0 %1960
        %v1962 = vsub.f32 %v1955, %v1933
        %v1963 = vsub.f32 %v1957, %v1934
        %v1964 = vsub.f32 %v1959, %v1935
        %v1965 = vsub.f32 %v1961, %v1936
        %v1966 = vmul.f32 %v1950, %v1962
        %v1967 = vmul.f32 %v1951, %v1963
        %v1968 = vmul.f32 %v1952, %v1964
        %v1969 = vmul.f32 %v1953, %v1965
        %v1970 = vadd.f32 %v1933, %v1966
        %v1971 = vadd.f32 %v1934, %v1967
        %v1972 = vadd.f32 %v1935, %v1968
        %v1973 = vadd.f32 %v1936, %v1969
        %v1974 = vshra.s32 %v1942, 1
        %v1975 = vshra.s32 %v1943, 1
        %v1976 = vshra.s32 %v1944, 1
        %v1977 = vshra.s32 %v1945, 1
        %v1978 = vand.u32 %v1974, 1
        %v1979 = vand.u32 %v1975, 1
        %v1980 = vand.u32 %v1976, 1
        %v1981 = vand.u32 %v1977, 1
        %v1982 = vcvt.s32.f32 %v1978
        %v1983 = vcvt.s32.f32 %v1979
        %v1984 = vcvt.s32.f32 %v1980
        %v1985 = vcvt.s32.f32 %v1981
        %1986 = vrot.lane.b32.xlu0 %v1970, 16
        %v1987 = vpop.permute.xlu0 %1986
        %1988 = vrot.lane.b32.xlu0 %v1971, 16
        %v1989 = vpop.permute.xlu0 %1988
        %1990 = vrot.lane.b32.xlu0 %v1972, 16
        %v1991 = vpop.permute.xlu0 %1990
        %1992 = vrot.lane.b32.xlu0 %v1973, 16
        %v1993 = vpop.permute.xlu0 %1992
        %v1994 = vsub.f32 %v1987, %v1970
        %v1995 = vsub.f32 %v1989, %v1971
        %v1996 = vsub.f32 %v1991, %v1972
        %v1997 = vsub.f32 %v1993, %v1973
        %v1998 = vmul.f32 %v1982, %v1994
        %v1999 = vmul.f32 %v1983, %v1995
        %v2000 = vmul.f32 %v1984, %v1996
        %v2001 = vmul.f32 %v1985, %v1997
        %v2002 = vadd.f32 %v1970, %v1998
        %v2003 = vadd.f32 %v1971, %v1999
        %v2004 = vadd.f32 %v1972, %v2000
        %v2005 = vadd.f32 %v1973, %v2001
        %v2006 = vshra.s32 %v1942, 2
        %v2007 = vshra.s32 %v1943, 2
        %v2008 = vshra.s32 %v1944, 2
        %v2009 = vshra.s32 %v1945, 2
        %v2010 = vand.u32 %v2006, 1
        %v2011 = vand.u32 %v2007, 1
        %v2012 = vand.u32 %v2008, 1
        %v2013 = vand.u32 %v2009, 1
        %v2014 = vcvt.s32.f32 %v2010
        %v2015 = vcvt.s32.f32 %v2011
        %v2016 = vcvt.s32.f32 %v2012
        %v2017 = vcvt.s32.f32 %v2013
        %2018 = vrot.lane.b32.xlu0 %v2002, 32
        %v2019 = vpop.permute.xlu0 %2018
        %2020 = vrot.lane.b32.xlu0 %v2003, 32
        %v2021 = vpop.permute.xlu0 %2020
        %2022 = vrot.lane.b32.xlu0 %v2004, 32
        %v2023 = vpop.permute.xlu0 %2022
        %2024 = vrot.lane.b32.xlu0 %v2005, 32
        %v2025 = vpop.permute.xlu0 %2024
        %v2026 = vsub.f32 %v2019, %v2002
        %v2027 = vsub.f32 %v2021, %v2003
        %v2028 = vsub.f32 %v2023, %v2004
        %v2029 = vsub.f32 %v2025, %v2005
        %v2030 = vmul.f32 %v2014, %v2026
        %v2031 = vmul.f32 %v2015, %v2027
        %v2032 = vmul.f32 %v2016, %v2028
        %v2033 = vmul.f32 %v2017, %v2029
        %v2034 = vadd.f32 %v2002, %v2030
        %v2035 = vadd.f32 %v2003, %v2031
        %v2036 = vadd.f32 %v2004, %v2032
        %v2037 = vadd.f32 %v2005, %v2033
        %v2038 = vshra.s32 %v1942, 3
        %v2039 = vshra.s32 %v1943, 3
        %v2040 = vshra.s32 %v1944, 3
        %v2041 = vshra.s32 %v1945, 3
        %v2042 = vand.u32 %v2038, 1
        %v2043 = vand.u32 %v2039, 1
        %v2044 = vand.u32 %v2040, 1
        %v2045 = vand.u32 %v2041, 1
        %v2046 = vcvt.s32.f32 %v2042
        %v2047 = vcvt.s32.f32 %v2043
        %v2048 = vcvt.s32.f32 %v2044
        %v2049 = vcvt.s32.f32 %v2045
        %2050 = vrot.lane.b32.xlu0 %v2034, 64
        %v2051 = vpop.permute.xlu0 %2050
        %2052 = vrot.lane.b32.xlu0 %v2035, 64
        %v2053 = vpop.permute.xlu0 %2052
        %2054 = vrot.lane.b32.xlu0 %v2036, 64
        %v2055 = vpop.permute.xlu0 %2054
        %2056 = vrot.lane.b32.xlu0 %v2037, 64
        %v2057 = vpop.permute.xlu0 %2056
        %v2058 = vsub.f32 %v2051, %v2034
        %v2059 = vsub.f32 %v2053, %v2035
        %v2060 = vsub.f32 %v2055, %v2036
        %v2061 = vsub.f32 %v2057, %v2037
        %v2062 = vmul.f32 %v2046, %v2058
        %v2063 = vmul.f32 %v2047, %v2059
        %v2064 = vmul.f32 %v2048, %v2060
        %v2065 = vmul.f32 %v2049, %v2061
        %v2066 = vadd.f32 %v2034, %v2062
        %v2067 = vadd.f32 %v2035, %v2063
        %v2068 = vadd.f32 %v2036, %v2064
        %v2069 = vadd.f32 %v2037, %v2065
        %v2070 = vadd.f32 %v2066, %v2067
        %v2071 = vrot.slane %v2070, 4
        %v2072 = vadd.f32 %v2070, %v2071
        %v2073 = vrot.slane %v2072, 2
        %v2074 = vadd.f32 %v2072, %v2073
        %v2075 = vrot.slane %v2074, 1
        %v2076 = vadd.f32 %v2074, %v2075
        %v2077 = vadd.f32 %v2068, %v2069
        %v2078 = vrot.slane %v2077, 4
        %v2079 = vadd.f32 %v2077, %v2078
        %v2080 = vrot.slane %v2079, 2
        %v2081 = vadd.f32 %v2079, %v2080
        %v2082 = vrot.slane %v2081, 1
        %v2083 = vadd.f32 %v2081, %v2082
        %vm2084 = vcmask 1040384
        %v2085 = vsel %vm2084, %v2076, %v2083
        %vm2086 = vcmask 1041408
        %v2087 = vsel %vm2086, %v2085, 0.0
        %2088 = vadd.xlane.f32.xlu0 %v2087
        %v2089 = vpop.xlane.xlu0 %2088
        %v2090 = vrcp.pop 128.0
        %v2091 = vmul.f32 128.0, %v2090
        %v2092 = vsub.f32 1.0, %v2091
        %v2093 = vmul.f32 %v2090, %v2092
        %v2094 = vadd.f32 %v2090, %v2093
        %vm2095 = vweird.f32 %v2090
        %v2096 = vsel %vm2095, %v2090, %v2094
        %v2097 = vmul.f32 %v2089, %v2096
        %v2098 = vsub.f32 %v2085, %v2097
        %v2099 = vand.u32 2147483647, %v2098
        %v2100 = vsel %vm2086, %v2099, -inf
        %2101 = vmax.xlane.f32.xlu0 %v2100
        %v2102 = vpop.xlane.xlu0 %2101
        %v2103 = vmax.f32 %v2102, 1e-12
        %v2104 = vrcp.pop %v2103
        %v2105 = vmul.f32 %v2103, %v2104
        %v2106 = vsub.f32 1.0, %v2105
        %v2107 = vmul.f32 %v2104, %v2106
        %v2108 = vadd.f32 %v2104, %v2107
        %vm2109 = vweird.f32 %v2103
        %vm2110 = vweird.f32 %v2104
        %vm2111 = vmor %vm2109, %vm2110
        %v2112 = vsel %vm2111, %v2104, %v2108
        %v2113 = vand.u32 2147483647, %v2103
        %vm2114 = vcmp.eq.f32.partialorder %v2113, 8.507059e+37
        %v2115 = vand.u32 %v2103, 2147483648
        %v2116 = vor.u32 1.1754944e-38, %v2115
        %v2117 = vsel %vm2114, %v2116, %v2112
        %v2118 = vmul.f32 %v2098, %v2117
        %2119 = vst [vmem:[%s309] sm:$0x3] %v2118
        %s2120 = sand.u32 %s166, 1
        %s2121 = scalar_lea.sflag [#allocation4], %s2120
        %s2122 = sand.u32 %s166, 1
        %s2123 = smul.addr %s2122, 2
        %s2124 = scalar_lea.vmem [#allocation8], %s2123
        // Predicated region
        $region57: #{_lambda_.1} parent=43 // pred_check
          %p2125 = pneg %p176
        $region58: #{_lambda_.1} parent=43 // pred_check_branch
          %2127 = sbr.rel (%p2125) target = $region60
        $region59: #{_lambda_.1} parent=43 // pred_region
          %2129 = vsyncadd %s2121, 0
          %s2130 = smul.addr %s22, 2
          %s2131 = scalar_lea.hbm %s6, %s2130
          %s2133 = sshll.u32 %s2124, 4
          %s2134 = int_to_ptr.vmem [resolvable:$true] %s2133
          %s2135 = sshll.u32 %s2131, 4
          %s2136 = int_to_ptr.hbm [resolvable:$true] %s2135
          %2138 = dma.vmem_to_hbm [thread:$0]  %s2134, 32, %s2136, %s2121
        $region60: #{_lambda_.1} parent=43 // pred_fallthru
          _
      $region44: #{_lambda_.1} parent=5 // pred_fallthru
        _
      %p2139 = scmp.le.s32.totalorder 2, %s17
      // Predicated region
      $region61: #{_lambda_.1} parent=5 // pred_check
        %p2140 = pneg %p2139
      $region62: #{_lambda_.1} parent=5 // pred_check_branch
        %2142 = sbr.rel (%p2140) target = $region64
      $region63: #{_lambda_.1} parent=5 // pred_region
        %s2143 = ssub.s32 %s17, 2
        // Predicated region
        $region65: #{_lambda_.1} parent=63 // pred_check
          %p2144 = pneg %p182
        $region66: #{_lambda_.1} parent=63 // pred_check_branch
          %2146 = sbr.rel (%p2144) target = $region68
        $region67: #{_lambda_.1} parent=63 // pred_region
          %s2147 = sand.u32 %s167, 1
          %s2148 = scalar_lea.sflag [#allocation4], %s2147
          %s2149 = sand.u32 %s167, 1
          %s2150 = smul.addr %s2149, 2
          %s2151 = scalar_lea.vmem [#allocation8], %s2150
          %2153 = dma.done %s2148, 32
        $region68: #{_lambda_.1} parent=63 // pred_fallthru
          _
      $region64: #{_lambda_.1} parent=5 // pred_fallthru
        _
    $region6: #{_lambda_.1} parent=1 // loop_footer
      %s21 = sadd.s32 1, %s17
    $region7: #{_lambda_.1} parent=1 // loop_footer_branch
      %16 = sbr.rel target = $region3
    $region8: #{_lambda_.1} parent=1 // loop_exit
      _
    %2154 = vsyncpa [#allocation3], 1
    %s2155 = scalar_lea.sflag [#allocation3], 1
    %2156 = vsyncpa %s2155, 1
    %2157 = vsyncpa [#allocation6], 1
    %2158 = vsyncpa [#allocation4], 1
    %s2159 = scalar_lea.sflag [#allocation4], 1
    %2160 = vsyncpa %s2159, 1

</llo_original>
